<compile_context>
chip_gen: v5e
topology: v5e:2x2
jax: 0.10.0
libtpu: 0.0.40
codegen_flags: <defaults>
</compile_context>

<pallas_src>
import functools

import jax
import jax.numpy as jnp
from jax.experimental import pallas as pl
from jax.experimental.pallas import tpu as pltpu


def _fused_kernel(x_ref, s_ref, w_ref, g_ref, b_ref, o_ref, *,
                  m_valid, use_bf16_matmul):
    # x_ref: (Cin, Mp)     activations, NCHW order flattened over N*H*W,
    #                      lane-padded with zeros to Mp (multiple of 128)
    # s_ref: (1, Cin)      per-input-channel scale (x301)
    # w_ref: (Cb, Cin)     1x1 conv weight slice, natural PyTorch layout (bf16)
    # g_ref: (Cb, 1)       batchnorm gamma slice
    # b_ref: (Cb, 1)       batchnorm beta slice
    # o_ref: (Cb, Mp)      output slice, channels-first
    eps = 0.001
    inv_m = 1.0 / m_valid              # divide by the TRUE row count, not Mp

    # Fold the channel scale into the small weight: W_s[o, i] = W[o, i] * s[i]
    # (Cout*Cin mults on the VPU instead of M*Cin on the activation tile).
    w_s = w_ref[...].astype(jnp.float32) * s_ref[...]          # (Cb, Cin)
    rhs = x_ref[...]
    if use_bf16_matmul:
        w_s = w_s.astype(jnp.bfloat16)
        if rhs.dtype != jnp.bfloat16:
            rhs = rhs.astype(jnp.bfloat16)   # skipped if producer fed bf16
    else:
        if rhs.dtype != jnp.float32:
            rhs = rhs.astype(jnp.float32)

    # 1x1 conv == matmul: (Cb, Cin) @ (Cin, Mp) -> (Cb, Mp) on the MXU,
    # f32 accumulation.  Padded columns of rhs are zero -> padded columns of
    # y are zero, so the reductions below are unaffected by the padding.
    y = jnp.dot(w_s, rhs, preferred_element_type=jnp.float32)

    # Single-pass BN statistics over the M axis (biased variance, as PyTorch
    # uses for normalization in training mode).
    sum_y = jnp.sum(y, axis=1, keepdims=True)                   # (Cb, 1)
    sum_yy = jnp.sum(y * y, axis=1, keepdims=True)              # (Cb, 1)
    mean = sum_y * inv_m
    var = jnp.maximum(sum_yy * inv_m - mean * mean, 0.0)        # clamp >= 0
    inv_std = jax.lax.rsqrt(var + eps)

    # Fused affine epilogue: o = y * a + c   (lane-dense, unmasked store).
    a = inv_std * g_ref[...]                                    # (Cb, 1)
    c = b_ref[...] - mean * a                                   # (Cb, 1)
    o_ref[...] = (y * a + c).astype(o_ref.dtype)


def _num_cout_blocks(cout):
    """2 Cout blocks on v7x (one per TensorCore), 1 on v5e/v6e (single TC)."""
    try:
        kind = jax.devices()[0].device_kind.lower()
    except Exception:
        return 1
    if "v7" in kind and cout % 2 == 0 and (cout // 2) % 8 == 0:
        return 2
    return 1


def fused_mul_conv1x1_bn(x_nchw, scale_nc11, w_oikk, gamma, beta,
                         *, use_bf16_matmul=True, pad_lanes=True,
                         out_dtype=jnp.float32):
    N, Cin, H, W = x_nchw.shape
    Cout = w_oikk.shape[0]
    M = N * H * W

    # (N, Cin, H, W) -> (Cin, N*H*W) keeping NCHW memory order.  For N == 1
    # this is a pure reshape (no HBM traffic).
    if N == 1:
        x_cm = x_nchw.reshape(Cin, M)
    else:
        x_cm = jnp.transpose(x_nchw, (1, 0, 2, 3)).reshape(Cin, M)

    # Lane-dense padding of M up to a multiple of 128.  In production the
    # producer of x302 should write this padded (bf16) slab directly.
    Mp = (-(-M // 128)) * 128 if pad_lanes else M
    if Mp != M:
        x_cm = jnp.pad(x_cm, ((0, 0), (0, Mp - M)))

    # Conv weight: cast once to bf16 (parameter-load cast), natural layout.
    w_dtype = jnp.bfloat16 if use_bf16_matmul else jnp.float32
    w2d = w_oikk.reshape(Cout, Cin).astype(w_dtype)
    s2d = scale_nc11.reshape(1, Cin).astype(jnp.float32)
    g2d = gamma.reshape(Cout, 1).astype(jnp.float32)
    b2d = beta.reshape(Cout, 1).astype(jnp.float32)

    nb = _num_cout_blocks(Cout)
    co_blk = Cout // nb

    kernel = functools.partial(_fused_kernel, m_valid=M,
                               use_bf16_matmul=use_bf16_matmul)

    flops = 2 * Mp * Cin * Cout
    bytes_accessed = (Cin * Mp * x_cm.dtype.itemsize
                      + Cout * Cin * jnp.dtype(w_dtype).itemsize
                      + Cout * Mp * jnp.dtype(out_dtype).itemsize
                      + 4 * (Cin + 2 * Cout))

    out_t = pl.pallas_call(
        kernel,
        out_shape=jax.ShapeDtypeStruct((Cout, Mp), out_dtype),
        grid=(nb,),
        in_specs=[
            pl.BlockSpec((Cin, Mp), lambda i: (0, 0)),     # x: shared block
            pl.BlockSpec((1, Cin), lambda i: (0, 0)),      # scale
            pl.BlockSpec((co_blk, Cin), lambda i: (i, 0)),  # weight slice
            pl.BlockSpec((co_blk, 1), lambda i: (i, 0)),    # gamma slice
            pl.BlockSpec((co_blk, 1), lambda i: (i, 0)),    # beta slice
        ],
        out_specs=pl.BlockSpec((co_blk, Mp), lambda i: (i, 0)),
        compiler_params=pltpu.CompilerParams(
            dimension_semantics=("parallel",)),
        cost_estimate=pl.CostEstimate(
            flops=flops, transcendentals=Cout, bytes_accessed=bytes_accessed),
    )(x_cm, s2d, w2d, g2d, b2d)

    # Drop the lane padding and restore NCHW (pure reshape for N == 1).
    out_t = out_t[:, :M]
    if N == 1:
        return out_t.reshape(1, Cout, H, W)
    return jnp.transpose(out_t.reshape(Cout, N, H, W), (1, 0, 2, 3))


def _reference(x_nchw, scale_nc11, w_oikk, gamma, beta, eps=1e-3):
    xs = x_nchw * scale_nc11
    y = jax.lax.conv_general_dilated(
        xs, w_oikk, window_strides=(1, 1), padding="VALID",
        dimension_numbers=("NCHW", "OIHW", "NCHW"))
    mean = jnp.mean(y, axis=(0, 2, 3), keepdims=True)
    var = jnp.mean((y - mean) ** 2, axis=(0, 2, 3), keepdims=True)
    g = gamma.reshape(1, -1, 1, 1)
    b = beta.reshape(1, -1, 1, 1)
    return (y - mean) * jax.lax.rsqrt(var + eps) * g + b


if __name__ == "__main__":
    key = jax.random.PRNGKey(0)
    k1, k2, k3 = jax.random.split(key, 3)

    N, Cin, H, W = 1, 768, 14, 14
    Cout = 128

    # Inputs (match the PyTorch module's tensor shapes).
    x296 = jax.random.normal(k1, (N, Cin, H, W), dtype=jnp.float32)
    x301 = jax.random.normal(k2, (N, Cin, 1, 1), dtype=jnp.float32)

    # Conv2d(768, 128, 1x1, bias=False) weight: (Cout, Cin, 1, 1).
    fan_in = Cin
    bound = 1.0 / jnp.sqrt(fan_in)
    w = jax.random.uniform(k3, (Cout, Cin, 1, 1), dtype=jnp.float32,
                           minval=-bound, maxval=bound)
    # BatchNorm2d(128) affine params (PyTorch default init).
    gamma = jnp.ones((Cout,), dtype=jnp.float32)
    beta = jnp.zeros((Cout,), dtype=jnp.float32)

    out = fused_mul_conv1x1_bn(x296, x301, w, gamma, beta)
    out = jax.block_until_ready(out)
    assert out.shape == (N, Cout, H, W)

    # Loose tolerance: bf16 weight + bf16 MXU inputs, f32 accumulation.
    ref = jax.block_until_ready(_reference(x296, x301, w, gamma, beta))
    max_diff = float(jnp.max(jnp.abs(out - ref)))
    assert max_diff < 0.15, f"max |diff| = {max_diff}"

    print("KERNEL_OK")
</pallas_src>

<mosaic_0001>
module attributes {stable_mosaic.version = 11 : i64} {
  func.func @_fused_kernel(%arg0: i32, %arg1: memref<768x256xf32, #tpu.memory_space<vmem>>, %arg2: memref<1x768xf32, #tpu.memory_space<vmem>>, %arg3: memref<128x768xbf16, #tpu.memory_space<vmem>>, %arg4: memref<128x1xf32, #tpu.memory_space<vmem>>, %arg5: memref<128x1xf32, #tpu.memory_space<vmem>>, %arg6: memref<128x256xf32, #tpu.memory_space<vmem>>) attributes {dimension_semantics = [#tpu.dimension_semantics<parallel>], iteration_bounds = array<i64: 1>, scalar_prefetch = 0 : i64, scratch_operands = 0 : i64, tpu.core_type = #tpu.core_type<tc>, window_params = [{pipeline_mode = #tpu.pipeline_mode<synchronous>, transform_indices = @transform_0, window_bounds = array<i64: 768, 256>}, {pipeline_mode = #tpu.pipeline_mode<synchronous>, transform_indices = @transform_1, window_bounds = array<i64: 1, 768>}, {transform_indices = @transform_2, window_bounds = array<i64: 128, 768>}, {transform_indices = @transform_3, window_bounds = array<i64: 128, 1>}, {transform_indices = @transform_4, window_bounds = array<i64: 128, 1>}, {transform_indices = @transform_5, window_bounds = array<i64: 128, 256>}]} {
    %c0 = arith.constant 0 : index
    %c0_0 = arith.constant 0 : index
    %0 = vector.load %arg3[%c0, %c0_0] : memref<128x768xbf16, #tpu.memory_space<vmem>>, vector<128x768xbf16>
    %1 = arith.extf %0 : vector<128x768xbf16> to vector<128x768xf32>
    %c0_1 = arith.constant 0 : index
    %c0_2 = arith.constant 0 : index
    %2 = vector.load %arg2[%c0_1, %c0_2] : memref<1x768xf32, #tpu.memory_space<vmem>>, vector<1x768xf32>
    %3 = vector.broadcast %2 : vector<1x768xf32> to vector<128x768xf32>
    %4 = arith.mulf %1, %3 : vector<128x768xf32>
    %c0_3 = arith.constant 0 : index
    %c0_4 = arith.constant 0 : index
    %5 = vector.load %arg1[%c0_3, %c0_4] : memref<768x256xf32, #tpu.memory_space<vmem>>, vector<768x256xf32>
    %6 = arith.truncf %4 : vector<128x768xf32> to vector<128x768xbf16>
    %7 = arith.truncf %5 : vector<768x256xf32> to vector<768x256xbf16>
    %cst = arith.constant dense<0.000000e+00> : vector<128x256xf32>
    %8 = tpu.matmul %6, %7, %cst {dimension_numbers = #tpu.dot_dimension_numbers<[1], [0], [0], [1], [0, 0, 1, 1], [], []>} : vector<128x768xbf16>, vector<768x256xbf16>, vector<128x256xf32> -> vector<128x256xf32>
    %cst_5 = arith.constant dense<0.000000e+00> : vector<128xf32>
    %9 = vector.multi_reduction <add>, %8, %cst_5 [1] : vector<128x256xf32> to vector<128xf32>
    %10 = vector.shape_cast %9 : vector<128xf32> to vector<128x1xf32>
    %11 = arith.mulf %8, %8 : vector<128x256xf32>
    %cst_6 = arith.constant dense<0.000000e+00> : vector<128xf32>
    %12 = vector.multi_reduction <add>, %11, %cst_6 [1] : vector<128x256xf32> to vector<128xf32>
    %13 = vector.shape_cast %12 : vector<128xf32> to vector<128x1xf32>
    %cst_7 = arith.constant 0.00510204071 : f32
    %14 = vector.broadcast %cst_7 : f32 to vector<128x1xf32>
    %15 = arith.mulf %10, %14 : vector<128x1xf32>
    %cst_8 = arith.constant 0.00510204071 : f32
    %16 = vector.broadcast %cst_8 : f32 to vector<128x1xf32>
    %17 = arith.mulf %13, %16 : vector<128x1xf32>
    %18 = arith.mulf %15, %15 : vector<128x1xf32>
    %19 = arith.subf %17, %18 : vector<128x1xf32>
    %cst_9 = arith.constant 0.000000e+00 : f32
    %20 = vector.broadcast %cst_9 : f32 to vector<128x1xf32>
    %21 = arith.maximumf %19, %20 : vector<128x1xf32>
    %cst_10 = arith.constant 1.000000e-03 : f32
    %22 = vector.broadcast %cst_10 : f32 to vector<128x1xf32>
    %23 = arith.addf %21, %22 : vector<128x1xf32>
    %24 = math.rsqrt %23 : vector<128x1xf32>
    %c0_11 = arith.constant 0 : index
    %c0_12 = arith.constant 0 : index
    %25 = vector.load %arg4[%c0_11, %c0_12] : memref<128x1xf32, #tpu.memory_space<vmem>>, vector<128x1xf32>
    %26 = arith.mulf %24, %25 : vector<128x1xf32>
    %c0_13 = arith.constant 0 : index
    %c0_14 = arith.constant 0 : index
    %27 = vector.load %arg5[%c0_13, %c0_14] : memref<128x1xf32, #tpu.memory_space<vmem>>, vector<128x1xf32>
    %28 = arith.mulf %15, %26 : vector<128x1xf32>
    %29 = arith.subf %27, %28 : vector<128x1xf32>
    %30 = vector.broadcast %26 : vector<128x1xf32> to vector<128x256xf32>
    %31 = arith.mulf %8, %30 : vector<128x256xf32>
    %32 = vector.broadcast %29 : vector<128x1xf32> to vector<128x256xf32>
    %33 = arith.addf %31, %32 : vector<128x256xf32>
    %c0_15 = arith.constant 0 : index
    %c0_16 = arith.constant 0 : index
    %34 = vector.load %arg6[%c0_15, %c0_16] : memref<128x256xf32, #tpu.memory_space<vmem>>, vector<128x256xf32>
    tpu.vector_store %arg6[%c0_15, %c0_16], %33 {strides = array<i32>} : memref<128x256xf32, #tpu.memory_space<vmem>>, vector<128x256xf32>,
    return
  }
  func.func @transform_0(%arg0: i32) -> (i32, i32) {
    %c0_i32 = arith.constant 0 : i32
    %c0_i32_0 = arith.constant 0 : i32
    %c0_i32_1 = arith.constant 0 : i32
    return %c0_i32, %c0_i32_0 : i32, i32
  }
  func.func @transform_1(%arg0: i32) -> (i32, i32) {
    %c0_i32 = arith.constant 0 : i32
    %c0_i32_0 = arith.constant 0 : i32
    %c0_i32_1 = arith.constant 0 : i32
    return %c0_i32, %c0_i32_0 : i32, i32
  }
  func.func @transform_2(%arg0: i32) -> (i32, i32) {
    %c0_i32 = arith.constant 0 : i32
    %c0_i32_0 = arith.constant 0 : i32
    return %arg0, %c0_i32 : i32, i32
  }
  func.func @transform_3(%arg0: i32) -> (i32, i32) {
    %c0_i32 = arith.constant 0 : i32
    %c0_i32_0 = arith.constant 0 : i32
    return %arg0, %c0_i32 : i32, i32
  }
  func.func @transform_4(%arg0: i32) -> (i32, i32) {
    %c0_i32 = arith.constant 0 : i32
    %c0_i32_0 = arith.constant 0 : i32
    return %arg0, %c0_i32 : i32, i32
  }
  func.func @transform_5(%arg0: i32) -> (i32, i32) {
    %c0_i32 = arith.constant 0 : i32
    %c0_i32_0 = arith.constant 0 : i32
    return %arg0, %c0_i32 : i32, i32
  }
}

</mosaic_0001>

<llo_original>
// kernel: tpu_custom_call.1
$region0: #{tpu_custom_call.1}
  #allocation0 [shape = 'u32[]', space=smem, size = 0x4, offset = 0x4, fixed_abs, tag = 'smem constant byte address 0x4 - core index']
  #allocation1 [shape = 'u32[72,128]{1,0:T(1,128)}', space=vmem, size = 0x9000, scoped, tag = 'internal scratch']
  %s0 = inlined_call_operand.hbm [shape: f32[768,256], index: 0, kind: input, shape index: {}]
  %s1 = inlined_call_operand.vmem [shape: f32[1,768], index: 1, kind: input, shape index: {}]
  %s2 = inlined_call_operand.hbm [shape: bf16[128,768], index: 2, kind: input, shape index: {}]
  %s3 = inlined_call_operand.vmem [shape: f32[128,1], index: 3, kind: input, shape index: {}]
  %s4 = inlined_call_operand.vmem [shape: f32[128,1], index: 4, kind: input, shape index: {}]
  %s5 = inlined_call_operand.hbm [shape: f32[128,256], index: 5, kind: output, shape index: {}]
  %s6 = sld [smem:[#allocation0]]
  $region38: #{tpu_custom_call.1} parent=0
    _
  %s8 = ssub.s32 1, %s6
  %s9 = scalar_select 0, %s8, %s6
  $region1: #{tpu_custom_call.1} parent=0
    #allocation2 [shape = 'u8[786432]{0}', space=vmem, size = 0xc0000, scoped, tag = 'input window, operand 0, single buffered']
    #allocation3 [shape = 's32[1]{0}', space=sflag, size = 0x4, scoped, tag = 'scoped memory for tpu_custom_call.1']
    #allocation4 [shape = 's32[1]{0}', space=sflag, size = 0x4, scoped, tag = 'scoped memory for tpu_custom_call.1']
    #allocation5 [shape = 'u8[196608]{0}', space=vmem, size = 0x30000, scoped, tag = 'input window, operand 2, single buffered']
    #allocation6 [shape = 's32[1]{0}', space=sflag, size = 0x4, scoped, tag = 'scoped memory for tpu_custom_call.1']
    #allocation7 [shape = 'u8[131072]{0}', space=vmem, size = 0x20000, scoped, tag = 'output window, operand 0, single buffered']
    %10 = vsyncpa [#allocation3], 0
    %11 = vsyncpa [#allocation6], 0
    %12 = vsyncpa [#allocation4], 0
    // Predicated region
    $region2: #{tpu_custom_call.1} parent=1 // pred_check
      _
    $region3: #{tpu_custom_call.1} parent=1 // pred_check_branch
      %14 = sbr.rel (0) target = $region5
    $region4: #{tpu_custom_call.1} parent=1 // pred_region
      %16 = vsyncadd [#allocation3], 0
      %s17 = sshll.u32 %s0, 4
      %s18 = int_to_ptr.hbm [resolvable:$true] %s17
      %s19 = sshll.u32 [#allocation2], 4
      %s20 = int_to_ptr.vmem [resolvable:$true] %s19
      %25 = dma.hbm_to_vmem [thread:$0]  %s18, 24576, %s20, [#allocation3], 256, 256, 16
    $region5: #{tpu_custom_call.1} parent=1 // pred_fallthru
      _
    // Predicated region
    $region6: #{tpu_custom_call.1} parent=1 // pred_check
      _
    $region7: #{tpu_custom_call.1} parent=1 // pred_check_branch
      %27 = sbr.rel (0) target = $region9
    $region8: #{tpu_custom_call.1} parent=1 // pred_region
      _
    $region9: #{tpu_custom_call.1} parent=1 // pred_fallthru
      _
    // Predicated region
    $region10: #{tpu_custom_call.1} parent=1 // pred_check
      _
    $region11: #{tpu_custom_call.1} parent=1 // pred_check_branch
      %29 = sbr.rel (0) target = $region13
    $region12: #{tpu_custom_call.1} parent=1 // pred_region
      %31 = vsyncadd [#allocation6], 0
      %s32 = sshll.u32 %s2, 4
      %s33 = int_to_ptr.hbm [resolvable:$true] %s32
      %s34 = sshll.u32 [#allocation5], 4
      %s35 = int_to_ptr.vmem [resolvable:$true] %s34
      %40 = dma.hbm_to_vmem [thread:$0]  %s33, 6144, %s35, [#allocation6], 384, 384, 24
    $region13: #{tpu_custom_call.1} parent=1 // pred_fallthru
      _
    // Predicated region
    $region14: #{tpu_custom_call.1} parent=1 // pred_check
      _
    $region15: #{tpu_custom_call.1} parent=1 // pred_check_branch
      %42 = sbr.rel (0) target = $region17
    $region16: #{tpu_custom_call.1} parent=1 // pred_region
      _
    $region17: #{tpu_custom_call.1} parent=1 // pred_fallthru
      _
    // Predicated region
    $region18: #{tpu_custom_call.1} parent=1 // pred_check
      _
    $region19: #{tpu_custom_call.1} parent=1 // pred_check_branch
      %44 = sbr.rel (0) target = $region21
    $region20: #{tpu_custom_call.1} parent=1 // pred_region
      _
    $region21: #{tpu_custom_call.1} parent=1 // pred_fallthru
      _
    // Predicated region
    $region22: #{tpu_custom_call.1} parent=1 // pred_check
      _
    $region23: #{tpu_custom_call.1} parent=1 // pred_check_branch
      %46 = sbr.rel (0) target = $region25
    $region24: #{tpu_custom_call.1} parent=1 // pred_region
      %48 = dma.done [#allocation3], 24576
    $region25: #{tpu_custom_call.1} parent=1 // pred_fallthru
      _
    // Predicated region
    $region26: #{tpu_custom_call.1} parent=1 // pred_check
      _
    $region27: #{tpu_custom_call.1} parent=1 // pred_check_branch
      %50 = sbr.rel (0) target = $region29
    $region28: #{tpu_custom_call.1} parent=1 // pred_region
      %52 = dma.done [#allocation6], 6144
    $region29: #{tpu_custom_call.1} parent=1 // pred_fallthru
      _
    %v53 = vld [vmem:[#allocation5] sm:$0xff]
    %v54 = vld [vmem:[#allocation5 + $0x8] sm:$0xff]
    %v55 = vld [vmem:[#allocation5 + $0x10] sm:$0xff]
    %v56 = vld [vmem:[#allocation5 + $0x18] sm:$0xff]
    %v57 = vld [vmem:[#allocation5 + $0x20] sm:$0xff]
    %v58 = vld [vmem:[#allocation5 + $0x28] sm:$0xff]
    %v59 = vld [vmem:[#allocation5 + $0x30] sm:$0xff]
    %v60 = vld [vmem:[#allocation5 + $0x38] sm:$0xff]
    %v61 = vld [vmem:[#allocation5 + $0x40] sm:$0xff]
    %v62 = vld [vmem:[#allocation5 + $0x48] sm:$0xff]
    %v63 = vld [vmem:[#allocation5 + $0x50] sm:$0xff]
    %v64 = vld [vmem:[#allocation5 + $0x58] sm:$0xff]
    %v65 = vld [vmem:[#allocation5 + $0x60] sm:$0xff]
    %v66 = vld [vmem:[#allocation5 + $0x68] sm:$0xff]
    %v67 = vld [vmem:[#allocation5 + $0x70] sm:$0xff]
    %v68 = vld [vmem:[#allocation5 + $0x78] sm:$0xff]
    %v69 = vld [vmem:[#allocation5 + $0x80] sm:$0xff]
    %v70 = vld [vmem:[#allocation5 + $0x88] sm:$0xff]
    %v71 = vld [vmem:[#allocation5 + $0x90] sm:$0xff]
    %v72 = vld [vmem:[#allocation5 + $0x98] sm:$0xff]
    %v73 = vld [vmem:[#allocation5 + $0xa0] sm:$0xff]
    %v74 = vld [vmem:[#allocation5 + $0xa8] sm:$0xff]
    %v75 = vld [vmem:[#allocation5 + $0xb0] sm:$0xff]
    %v76 = vld [vmem:[#allocation5 + $0xb8] sm:$0xff]
    %v77 = vld [vmem:[#allocation5 + $0xc0] sm:$0xff]
    %v78 = vld [vmem:[#allocation5 + $0xc8] sm:$0xff]
    %v79 = vld [vmem:[#allocation5 + $0xd0] sm:$0xff]
    %v80 = vld [vmem:[#allocation5 + $0xd8] sm:$0xff]
    %v81 = vld [vmem:[#allocation5 + $0xe0] sm:$0xff]
    %v82 = vld [vmem:[#allocation5 + $0xe8] sm:$0xff]
    %v83 = vld [vmem:[#allocation5 + $0xf0] sm:$0xff]
    %v84 = vld [vmem:[#allocation5 + $0xf8] sm:$0xff]
    %v85 = vld [vmem:[#allocation5 + $0x100] sm:$0xff]
    %v86 = vld [vmem:[#allocation5 + $0x108] sm:$0xff]
    %v87 = vld [vmem:[#allocation5 + $0x110] sm:$0xff]
    %v88 = vld [vmem:[#allocation5 + $0x118] sm:$0xff]
    %v89 = vld [vmem:[#allocation5 + $0x120] sm:$0xff]
    %v90 = vld [vmem:[#allocation5 + $0x128] sm:$0xff]
    %v91 = vld [vmem:[#allocation5 + $0x130] sm:$0xff]
    %v92 = vld [vmem:[#allocation5 + $0x138] sm:$0xff]
    %v93 = vld [vmem:[#allocation5 + $0x140] sm:$0xff]
    %v94 = vld [vmem:[#allocation5 + $0x148] sm:$0xff]
    %v95 = vld [vmem:[#allocation5 + $0x150] sm:$0xff]
    %v96 = vld [vmem:[#allocation5 + $0x158] sm:$0xff]
    %v97 = vld [vmem:[#allocation5 + $0x160] sm:$0xff]
    %v98 = vld [vmem:[#allocation5 + $0x168] sm:$0xff]
    %v99 = vld [vmem:[#allocation5 + $0x170] sm:$0xff]
    %v100 = vld [vmem:[#allocation5 + $0x178] sm:$0xff]
    %v101 = vunpack.c.l.bf16 %v53
    %v102 = vunpack.c.h.bf16 %v53
    %v103 = vunpack.c.l.bf16 %v54
    %v104 = vunpack.c.h.bf16 %v54
    %v105 = vunpack.c.l.bf16 %v55
    %v106 = vunpack.c.h.bf16 %v55
    %v107 = vunpack.c.l.bf16 %v56
    %v108 = vunpack.c.h.bf16 %v56
    %v109 = vunpack.c.l.bf16 %v57
    %v110 = vunpack.c.h.bf16 %v57
    %v111 = vunpack.c.l.bf16 %v58
    %v112 = vunpack.c.h.bf16 %v58
    %v113 = vunpack.c.l.bf16 %v59
    %v114 = vunpack.c.h.bf16 %v59
    %v115 = vunpack.c.l.bf16 %v60
    %v116 = vunpack.c.h.bf16 %v60
    %v117 = vunpack.c.l.bf16 %v61
    %v118 = vunpack.c.h.bf16 %v61
    %v119 = vunpack.c.l.bf16 %v62
    %v120 = vunpack.c.h.bf16 %v62
    %v121 = vunpack.c.l.bf16 %v63
    %v122 = vunpack.c.h.bf16 %v63
    %v123 = vunpack.c.l.bf16 %v64
    %v124 = vunpack.c.h.bf16 %v64
    %v125 = vunpack.c.l.bf16 %v65
    %v126 = vunpack.c.h.bf16 %v65
    %v127 = vunpack.c.l.bf16 %v66
    %v128 = vunpack.c.h.bf16 %v66
    %v129 = vunpack.c.l.bf16 %v67
    %v130 = vunpack.c.h.bf16 %v67
    %v131 = vunpack.c.l.bf16 %v68
    %v132 = vunpack.c.h.bf16 %v68
    %v133 = vunpack.c.l.bf16 %v69
    %v134 = vunpack.c.h.bf16 %v69
    %v135 = vunpack.c.l.bf16 %v70
    %v136 = vunpack.c.h.bf16 %v70
    %v137 = vunpack.c.l.bf16 %v71
    %v138 = vunpack.c.h.bf16 %v71
    %v139 = vunpack.c.l.bf16 %v72
    %v140 = vunpack.c.h.bf16 %v72
    %v141 = vunpack.c.l.bf16 %v73
    %v142 = vunpack.c.h.bf16 %v73
    %v143 = vunpack.c.l.bf16 %v74
    %v144 = vunpack.c.h.bf16 %v74
    %v145 = vunpack.c.l.bf16 %v75
    %v146 = vunpack.c.h.bf16 %v75
    %v147 = vunpack.c.l.bf16 %v76
    %v148 = vunpack.c.h.bf16 %v76
    %v149 = vunpack.c.l.bf16 %v77
    %v150 = vunpack.c.h.bf16 %v77
    %v151 = vunpack.c.l.bf16 %v78
    %v152 = vunpack.c.h.bf16 %v78
    %v153 = vunpack.c.l.bf16 %v79
    %v154 = vunpack.c.h.bf16 %v79
    %v155 = vunpack.c.l.bf16 %v80
    %v156 = vunpack.c.h.bf16 %v80
    %v157 = vunpack.c.l.bf16 %v81
    %v158 = vunpack.c.h.bf16 %v81
    %v159 = vunpack.c.l.bf16 %v82
    %v160 = vunpack.c.h.bf16 %v82
    %v161 = vunpack.c.l.bf16 %v83
    %v162 = vunpack.c.h.bf16 %v83
    %v163 = vunpack.c.l.bf16 %v84
    %v164 = vunpack.c.h.bf16 %v84
    %v165 = vunpack.c.l.bf16 %v85
    %v166 = vunpack.c.h.bf16 %v85
    %v167 = vunpack.c.l.bf16 %v86
    %v168 = vunpack.c.h.bf16 %v86
    %v169 = vunpack.c.l.bf16 %v87
    %v170 = vunpack.c.h.bf16 %v87
    %v171 = vunpack.c.l.bf16 %v88
    %v172 = vunpack.c.h.bf16 %v88
    %v173 = vunpack.c.l.bf16 %v89
    %v174 = vunpack.c.h.bf16 %v89
    %v175 = vunpack.c.l.bf16 %v90
    %v176 = vunpack.c.h.bf16 %v90
    %v177 = vunpack.c.l.bf16 %v91
    %v178 = vunpack.c.h.bf16 %v91
    %v179 = vunpack.c.l.bf16 %v92
    %v180 = vunpack.c.h.bf16 %v92
    %v181 = vunpack.c.l.bf16 %v93
    %v182 = vunpack.c.h.bf16 %v93
    %v183 = vunpack.c.l.bf16 %v94
    %v184 = vunpack.c.h.bf16 %v94
    %v185 = vunpack.c.l.bf16 %v95
    %v186 = vunpack.c.h.bf16 %v95
    %v187 = vunpack.c.l.bf16 %v96
    %v188 = vunpack.c.h.bf16 %v96
    %v189 = vunpack.c.l.bf16 %v97
    %v190 = vunpack.c.h.bf16 %v97
    %v191 = vunpack.c.l.bf16 %v98
    %v192 = vunpack.c.h.bf16 %v98
    %v193 = vunpack.c.l.bf16 %v99
    %v194 = vunpack.c.h.bf16 %v99
    %v195 = vunpack.c.l.bf16 %v100
    %v196 = vunpack.c.h.bf16 %v100
    %v197 = vld [vmem:[%s1] sm:$0x3f]
    %v199 = vperm.slane %v197, 0
    %v200 = vperm.slane %v197, 1
    %v201 = vperm.slane %v197, 2
    %v202 = vperm.slane %v197, 3
    %v203 = vperm.slane %v197, 4
    %v204 = vperm.slane %v197, 5
    %v211 = vmul.f32 %v101, %v199
    %v212 = vmul.f32 %v102, %v200
    %v213 = vmul.f32 %v103, %v201
    %v214 = vmul.f32 %v104, %v202
    %v215 = vmul.f32 %v105, %v203
    %v216 = vmul.f32 %v106, %v204
    %v217 = vmul.f32 %v107, %v199
    %v218 = vmul.f32 %v108, %v200
    %v219 = vmul.f32 %v109, %v201
    %v220 = vmul.f32 %v110, %v202
    %v221 = vmul.f32 %v111, %v203
    %v222 = vmul.f32 %v112, %v204
    %v223 = vmul.f32 %v113, %v199
    %v224 = vmul.f32 %v114, %v200
    %v225 = vmul.f32 %v115, %v201
    %v226 = vmul.f32 %v116, %v202
    %v227 = vmul.f32 %v117, %v203
    %v228 = vmul.f32 %v118, %v204
    %v229 = vmul.f32 %v119, %v199
    %v230 = vmul.f32 %v120, %v200
    %v231 = vmul.f32 %v121, %v201
    %v232 = vmul.f32 %v122, %v202
    %v233 = vmul.f32 %v123, %v203
    %v234 = vmul.f32 %v124, %v204
    %v235 = vmul.f32 %v125, %v199
    %v236 = vmul.f32 %v126, %v200
    %v237 = vmul.f32 %v127, %v201
    %v238 = vmul.f32 %v128, %v202
    %v239 = vmul.f32 %v129, %v203
    %v240 = vmul.f32 %v130, %v204
    %v241 = vmul.f32 %v131, %v199
    %v242 = vmul.f32 %v132, %v200
    %v243 = vmul.f32 %v133, %v201
    %v244 = vmul.f32 %v134, %v202
    %v245 = vmul.f32 %v135, %v203
    %v246 = vmul.f32 %v136, %v204
    %v247 = vmul.f32 %v137, %v199
    %v248 = vmul.f32 %v138, %v200
    %v249 = vmul.f32 %v139, %v201
    %v250 = vmul.f32 %v140, %v202
    %v251 = vmul.f32 %v141, %v203
    %v252 = vmul.f32 %v142, %v204
    %v253 = vmul.f32 %v143, %v199
    %v254 = vmul.f32 %v144, %v200
    %v255 = vmul.f32 %v145, %v201
    %v256 = vmul.f32 %v146, %v202
    %v257 = vmul.f32 %v147, %v203
    %v258 = vmul.f32 %v148, %v204
    %v259 = vmul.f32 %v149, %v199
    %v260 = vmul.f32 %v150, %v200
    %v261 = vmul.f32 %v151, %v201
    %v262 = vmul.f32 %v152, %v202
    %v263 = vmul.f32 %v153, %v203
    %v264 = vmul.f32 %v154, %v204
    %v265 = vmul.f32 %v155, %v199
    %v266 = vmul.f32 %v156, %v200
    %v267 = vmul.f32 %v157, %v201
    %v268 = vmul.f32 %v158, %v202
    %v269 = vmul.f32 %v159, %v203
    %v270 = vmul.f32 %v160, %v204
    %v271 = vmul.f32 %v161, %v199
    %v272 = vmul.f32 %v162, %v200
    %v273 = vmul.f32 %v163, %v201
    %v274 = vmul.f32 %v164, %v202
    %v275 = vmul.f32 %v165, %v203
    %v276 = vmul.f32 %v166, %v204
    %v277 = vmul.f32 %v167, %v199
    %v278 = vmul.f32 %v168, %v200
    %v279 = vmul.f32 %v169, %v201
    %v280 = vmul.f32 %v170, %v202
    %v281 = vmul.f32 %v171, %v203
    %v282 = vmul.f32 %v172, %v204
    %v283 = vmul.f32 %v173, %v199
    %v284 = vmul.f32 %v174, %v200
    %v285 = vmul.f32 %v175, %v201
    %v286 = vmul.f32 %v176, %v202
    %v287 = vmul.f32 %v177, %v203
    %v288 = vmul.f32 %v178, %v204
    %v289 = vmul.f32 %v179, %v199
    %v290 = vmul.f32 %v180, %v200
    %v291 = vmul.f32 %v181, %v201
    %v292 = vmul.f32 %v182, %v202
    %v293 = vmul.f32 %v183, %v203
    %v294 = vmul.f32 %v184, %v204
    %v295 = vmul.f32 %v185, %v199
    %v296 = vmul.f32 %v186, %v200
    %v297 = vmul.f32 %v187, %v201
    %v298 = vmul.f32 %v188, %v202
    %v299 = vmul.f32 %v189, %v203
    %v300 = vmul.f32 %v190, %v204
    %v301 = vmul.f32 %v191, %v199
    %v302 = vmul.f32 %v192, %v200
    %v303 = vmul.f32 %v193, %v201
    %v304 = vmul.f32 %v194, %v202
    %v305 = vmul.f32 %v195, %v203
    %v306 = vmul.f32 %v196, %v204
    %v307 = vld [vmem:[#allocation2] sm:$0xff]
    %v308 = vld [vmem:[#allocation2 + $0x8] sm:$0xff]
    %v309 = vld [vmem:[#allocation2 + $0x10] sm:$0xff]
    %v310 = vld [vmem:[#allocation2 + $0x18] sm:$0xff]
    %v311 = vld [vmem:[#allocation2 + $0x20] sm:$0xff]
    %v312 = vld [vmem:[#allocation2 + $0x28] sm:$0xff]
    %v313 = vld [vmem:[#allocation2 + $0x30] sm:$0xff]
    %v314 = vld [vmem:[#allocation2 + $0x38] sm:$0xff]
    %v315 = vld [vmem:[#allocation2 + $0x40] sm:$0xff]
    %v316 = vld [vmem:[#allocation2 + $0x48] sm:$0xff]
    %v317 = vld [vmem:[#allocation2 + $0x50] sm:$0xff]
    %v318 = vld [vmem:[#allocation2 + $0x58] sm:$0xff]
    %v319 = vld [vmem:[#allocation2 + $0x60] sm:$0xff]
    %v320 = vld [vmem:[#allocation2 + $0x68] sm:$0xff]
    %v321 = vld [vmem:[#allocation2 + $0x70] sm:$0xff]
    %v322 = vld [vmem:[#allocation2 + $0x78] sm:$0xff]
    %v323 = vld [vmem:[#allocation2 + $0x80] sm:$0xff]
    %v324 = vld [vmem:[#allocation2 + $0x88] sm:$0xff]
    %v325 = vld [vmem:[#allocation2 + $0x90] sm:$0xff]
    %v326 = vld [vmem:[#allocation2 + $0x98] sm:$0xff]
    %v327 = vld [vmem:[#allocation2 + $0xa0] sm:$0xff]
    %v328 = vld [vmem:[#allocation2 + $0xa8] sm:$0xff]
    %v329 = vld [vmem:[#allocation2 + $0xb0] sm:$0xff]
    %v330 = vld [vmem:[#allocation2 + $0xb8] sm:$0xff]
    %v331 = vld [vmem:[#allocation2 + $0xc0] sm:$0xff]
    %v332 = vld [vmem:[#allocation2 + $0xc8] sm:$0xff]
    %v333 = vld [vmem:[#allocation2 + $0xd0] sm:$0xff]
    %v334 = vld [vmem:[#allocation2 + $0xd8] sm:$0xff]
    %v335 = vld [vmem:[#allocation2 + $0xe0] sm:$0xff]
    %v336 = vld [vmem:[#allocation2 + $0xe8] sm:$0xff]
    %v337 = vld [vmem:[#allocation2 + $0xf0] sm:$0xff]
    %v338 = vld [vmem:[#allocation2 + $0xf8] sm:$0xff]
    %v339 = vld [vmem:[#allocation2 + $0x100] sm:$0xff]
    %v340 = vld [vmem:[#allocation2 + $0x108] sm:$0xff]
    %v341 = vld [vmem:[#allocation2 + $0x110] sm:$0xff]
    %v342 = vld [vmem:[#allocation2 + $0x118] sm:$0xff]
    %v343 = vld [vmem:[#allocation2 + $0x120] sm:$0xff]
    %v344 = vld [vmem:[#allocation2 + $0x128] sm:$0xff]
    %v345 = vld [vmem:[#allocation2 + $0x130] sm:$0xff]
    %v346 = vld [vmem:[#allocation2 + $0x138] sm:$0xff]
    %v347 = vld [vmem:[#allocation2 + $0x140] sm:$0xff]
    %v348 = vld [vmem:[#allocation2 + $0x148] sm:$0xff]
    %v349 = vld [vmem:[#allocation2 + $0x150] sm:$0xff]
    %v350 = vld [vmem:[#allocation2 + $0x158] sm:$0xff]
    %v351 = vld [vmem:[#allocation2 + $0x160] sm:$0xff]
    %v352 = vld [vmem:[#allocation2 + $0x168] sm:$0xff]
    %v353 = vld [vmem:[#allocation2 + $0x170] sm:$0xff]
    %v354 = vld [vmem:[#allocation2 + $0x178] sm:$0xff]
    %v355 = vld [vmem:[#allocation2 + $0x180] sm:$0xff]
    %v356 = vld [vmem:[#allocation2 + $0x188] sm:$0xff]
    %v357 = vld [vmem:[#allocation2 + $0x190] sm:$0xff]
    %v358 = vld [vmem:[#allocation2 + $0x198] sm:$0xff]
    %v359 = vld [vmem:[#allocation2 + $0x1a0] sm:$0xff]
    %v360 = vld [vmem:[#allocation2 + $0x1a8] sm:$0xff]
    %v361 = vld [vmem:[#allocation2 + $0x1b0] sm:$0xff]
    %v362 = vld [vmem:[#allocation2 + $0x1b8] sm:$0xff]
    %v363 = vld [vmem:[#allocation2 + $0x1c0] sm:$0xff]
    %v364 = vld [vmem:[#allocation2 + $0x1c8] sm:$0xff]
    %v365 = vld [vmem:[#allocation2 + $0x1d0] sm:$0xff]
    %v366 = vld [vmem:[#allocation2 + $0x1d8] sm:$0xff]
    %v367 = vld [vmem:[#allocation2 + $0x1e0] sm:$0xff]
    %v368 = vld [vmem:[#allocation2 + $0x1e8] sm:$0xff]
    %v369 = vld [vmem:[#allocation2 + $0x1f0] sm:$0xff]
    %v370 = vld [vmem:[#allocation2 + $0x1f8] sm:$0xff]
    %v371 = vld [vmem:[#allocation2 + $0x200] sm:$0xff]
    %v372 = vld [vmem:[#allocation2 + $0x208] sm:$0xff]
    %v373 = vld [vmem:[#allocation2 + $0x210] sm:$0xff]
    %v374 = vld [vmem:[#allocation2 + $0x218] sm:$0xff]
    %v375 = vld [vmem:[#allocation2 + $0x220] sm:$0xff]
    %v376 = vld [vmem:[#allocation2 + $0x228] sm:$0xff]
    %v377 = vld [vmem:[#allocation2 + $0x230] sm:$0xff]
    %v378 = vld [vmem:[#allocation2 + $0x238] sm:$0xff]
    %v379 = vld [vmem:[#allocation2 + $0x240] sm:$0xff]
    %v380 = vld [vmem:[#allocation2 + $0x248] sm:$0xff]
    %v381 = vld [vmem:[#allocation2 + $0x250] sm:$0xff]
    %v382 = vld [vmem:[#allocation2 + $0x258] sm:$0xff]
    %v383 = vld [vmem:[#allocation2 + $0x260] sm:$0xff]
    %v384 = vld [vmem:[#allocation2 + $0x268] sm:$0xff]
    %v385 = vld [vmem:[#allocation2 + $0x270] sm:$0xff]
    %v386 = vld [vmem:[#allocation2 + $0x278] sm:$0xff]
    %v387 = vld [vmem:[#allocation2 + $0x280] sm:$0xff]
    %v388 = vld [vmem:[#allocation2 + $0x288] sm:$0xff]
    %v389 = vld [vmem:[#allocation2 + $0x290] sm:$0xff]
    %v390 = vld [vmem:[#allocation2 + $0x298] sm:$0xff]
    %v391 = vld [vmem:[#allocation2 + $0x2a0] sm:$0xff]
    %v392 = vld [vmem:[#allocation2 + $0x2a8] sm:$0xff]
    %v393 = vld [vmem:[#allocation2 + $0x2b0] sm:$0xff]
    %v394 = vld [vmem:[#allocation2 + $0x2b8] sm:$0xff]
    %v395 = vld [vmem:[#allocation2 + $0x2c0] sm:$0xff]
    %v396 = vld [vmem:[#allocation2 + $0x2c8] sm:$0xff]
    %v397 = vld [vmem:[#allocation2 + $0x2d0] sm:$0xff]
    %v398 = vld [vmem:[#allocation2 + $0x2d8] sm:$0xff]
    %v399 = vld [vmem:[#allocation2 + $0x2e0] sm:$0xff]
    %v400 = vld [vmem:[#allocation2 + $0x2e8] sm:$0xff]
    %v401 = vld [vmem:[#allocation2 + $0x2f0] sm:$0xff]
    %v402 = vld [vmem:[#allocation2 + $0x2f8] sm:$0xff]
    %v403 = vld [vmem:[#allocation2 + $0x300] sm:$0xff]
    %v404 = vld [vmem:[#allocation2 + $0x308] sm:$0xff]
    %v405 = vld [vmem:[#allocation2 + $0x310] sm:$0xff]
    %v406 = vld [vmem:[#allocation2 + $0x318] sm:$0xff]
    %v407 = vld [vmem:[#allocation2 + $0x320] sm:$0xff]
    %v408 = vld [vmem:[#allocation2 + $0x328] sm:$0xff]
    %v409 = vld [vmem:[#allocation2 + $0x330] sm:$0xff]
    %v410 = vld [vmem:[#allocation2 + $0x338] sm:$0xff]
    %v411 = vld [vmem:[#allocation2 + $0x340] sm:$0xff]
    %v412 = vld [vmem:[#allocation2 + $0x348] sm:$0xff]
    %v413 = vld [vmem:[#allocation2 + $0x350] sm:$0xff]
    %v414 = vld [vmem:[#allocation2 + $0x358] sm:$0xff]
    %v415 = vld [vmem:[#allocation2 + $0x360] sm:$0xff]
    %v416 = vld [vmem:[#allocation2 + $0x368] sm:$0xff]
    %v417 = vld [vmem:[#allocation2 + $0x370] sm:$0xff]
    %v418 = vld [vmem:[#allocation2 + $0x378] sm:$0xff]
    %v419 = vld [vmem:[#allocation2 + $0x380] sm:$0xff]
    %v420 = vld [vmem:[#allocation2 + $0x388] sm:$0xff]
    %v421 = vld [vmem:[#allocation2 + $0x390] sm:$0xff]
    %v422 = vld [vmem:[#allocation2 + $0x398] sm:$0xff]
    %v423 = vld [vmem:[#allocation2 + $0x3a0] sm:$0xff]
    %v424 = vld [vmem:[#allocation2 + $0x3a8] sm:$0xff]
    %v425 = vld [vmem:[#allocation2 + $0x3b0] sm:$0xff]
    %v426 = vld [vmem:[#allocation2 + $0x3b8] sm:$0xff]
    %v427 = vld [vmem:[#allocation2 + $0x3c0] sm:$0xff]
    %v428 = vld [vmem:[#allocation2 + $0x3c8] sm:$0xff]
    %v429 = vld [vmem:[#allocation2 + $0x3d0] sm:$0xff]
    %v430 = vld [vmem:[#allocation2 + $0x3d8] sm:$0xff]
    %v431 = vld [vmem:[#allocation2 + $0x3e0] sm:$0xff]
    %v432 = vld [vmem:[#allocation2 + $0x3e8] sm:$0xff]
    %v433 = vld [vmem:[#allocation2 + $0x3f0] sm:$0xff]
    %v434 = vld [vmem:[#allocation2 + $0x3f8] sm:$0xff]
    %v435 = vld [vmem:[#allocation2 + $0x400] sm:$0xff]
    %v436 = vld [vmem:[#allocation2 + $0x408] sm:$0xff]
    %v437 = vld [vmem:[#allocation2 + $0x410] sm:$0xff]
    %v438 = vld [vmem:[#allocation2 + $0x418] sm:$0xff]
    %v439 = vld [vmem:[#allocation2 + $0x420] sm:$0xff]
    %v440 = vld [vmem:[#allocation2 + $0x428] sm:$0xff]
    %v441 = vld [vmem:[#allocation2 + $0x430] sm:$0xff]
    %v442 = vld [vmem:[#allocation2 + $0x438] sm:$0xff]
    %v443 = vld [vmem:[#allocation2 + $0x440] sm:$0xff]
    %v444 = vld [vmem:[#allocation2 + $0x448] sm:$0xff]
    %v445 = vld [vmem:[#allocation2 + $0x450] sm:$0xff]
    %v446 = vld [vmem:[#allocation2 + $0x458] sm:$0xff]
    %v447 = vld [vmem:[#allocation2 + $0x460] sm:$0xff]
    %v448 = vld [vmem:[#allocation2 + $0x468] sm:$0xff]
    %v449 = vld [vmem:[#allocation2 + $0x470] sm:$0xff]
    %v450 = vld [vmem:[#allocation2 + $0x478] sm:$0xff]
    %v451 = vld [vmem:[#allocation2 + $0x480] sm:$0xff]
    %v452 = vld [vmem:[#allocation2 + $0x488] sm:$0xff]
    %v453 = vld [vmem:[#allocation2 + $0x490] sm:$0xff]
    %v454 = vld [vmem:[#allocation2 + $0x498] sm:$0xff]
    %v455 = vld [vmem:[#allocation2 + $0x4a0] sm:$0xff]
    %v456 = vld [vmem:[#allocation2 + $0x4a8] sm:$0xff]
    %v457 = vld [vmem:[#allocation2 + $0x4b0] sm:$0xff]
    %v458 = vld [vmem:[#allocation2 + $0x4b8] sm:$0xff]
    %v459 = vld [vmem:[#allocation2 + $0x4c0] sm:$0xff]
    %v460 = vld [vmem:[#allocation2 + $0x4c8] sm:$0xff]
    %v461 = vld [vmem:[#allocation2 + $0x4d0] sm:$0xff]
    %v462 = vld [vmem:[#allocation2 + $0x4d8] sm:$0xff]
    %v463 = vld [vmem:[#allocation2 + $0x4e0] sm:$0xff]
    %v464 = vld [vmem:[#allocation2 + $0x4e8] sm:$0xff]
    %v465 = vld [vmem:[#allocation2 + $0x4f0] sm:$0xff]
    %v466 = vld [vmem:[#allocation2 + $0x4f8] sm:$0xff]
    %v467 = vld [vmem:[#allocation2 + $0x500] sm:$0xff]
    %v468 = vld [vmem:[#allocation2 + $0x508] sm:$0xff]
    %v469 = vld [vmem:[#allocation2 + $0x510] sm:$0xff]
    %v470 = vld [vmem:[#allocation2 + $0x518] sm:$0xff]
    %v471 = vld [vmem:[#allocation2 + $0x520] sm:$0xff]
    %v472 = vld [vmem:[#allocation2 + $0x528] sm:$0xff]
    %v473 = vld [vmem:[#allocation2 + $0x530] sm:$0xff]
    %v474 = vld [vmem:[#allocation2 + $0x538] sm:$0xff]
    %v475 = vld [vmem:[#allocation2 + $0x540] sm:$0xff]
    %v476 = vld [vmem:[#allocation2 + $0x548] sm:$0xff]
    %v477 = vld [vmem:[#allocation2 + $0x550] sm:$0xff]
    %v478 = vld [vmem:[#allocation2 + $0x558] sm:$0xff]
    %v479 = vld [vmem:[#allocation2 + $0x560] sm:$0xff]
    %v480 = vld [vmem:[#allocation2 + $0x568] sm:$0xff]
    %v481 = vld [vmem:[#allocation2 + $0x570] sm:$0xff]
    %v482 = vld [vmem:[#allocation2 + $0x578] sm:$0xff]
    %v483 = vld [vmem:[#allocation2 + $0x580] sm:$0xff]
    %v484 = vld [vmem:[#allocation2 + $0x588] sm:$0xff]
    %v485 = vld [vmem:[#allocation2 + $0x590] sm:$0xff]
    %v486 = vld [vmem:[#allocation2 + $0x598] sm:$0xff]
    %v487 = vld [vmem:[#allocation2 + $0x5a0] sm:$0xff]
    %v488 = vld [vmem:[#allocation2 + $0x5a8] sm:$0xff]
    %v489 = vld [vmem:[#allocation2 + $0x5b0] sm:$0xff]
    %v490 = vld [vmem:[#allocation2 + $0x5b8] sm:$0xff]
    %v491 = vld [vmem:[#allocation2 + $0x5c0] sm:$0xff]
    %v492 = vld [vmem:[#allocation2 + $0x5c8] sm:$0xff]
    %v493 = vld [vmem:[#allocation2 + $0x5d0] sm:$0xff]
    %v494 = vld [vmem:[#allocation2 + $0x5d8] sm:$0xff]
    %v495 = vld [vmem:[#allocation2 + $0x5e0] sm:$0xff]
    %v496 = vld [vmem:[#allocation2 + $0x5e8] sm:$0xff]
    %v497 = vld [vmem:[#allocation2 + $0x5f0] sm:$0xff]
    %v498 = vld [vmem:[#allocation2 + $0x5f8] sm:$0xff]
    %v499 = vpack.c.bf16 %v217, %v211
    %v500 = vpack.c.bf16 %v218, %v212
    %v501 = vpack.c.bf16 %v219, %v213
    %v502 = vpack.c.bf16 %v220, %v214
    %v503 = vpack.c.bf16 %v221, %v215
    %v504 = vpack.c.bf16 %v222, %v216
    %v505 = vpack.c.bf16 %v229, %v223
    %v506 = vpack.c.bf16 %v230, %v224
    %v507 = vpack.c.bf16 %v231, %v225
    %v508 = vpack.c.bf16 %v232, %v226
    %v509 = vpack.c.bf16 %v233, %v227
    %v510 = vpack.c.bf16 %v234, %v228
    %v511 = vpack.c.bf16 %v241, %v235
    %v512 = vpack.c.bf16 %v242, %v236
    %v513 = vpack.c.bf16 %v243, %v237
    %v514 = vpack.c.bf16 %v244, %v238
    %v515 = vpack.c.bf16 %v245, %v239
    %v516 = vpack.c.bf16 %v246, %v240
    %v517 = vpack.c.bf16 %v253, %v247
    %v518 = vpack.c.bf16 %v254, %v248
    %v519 = vpack.c.bf16 %v255, %v249
    %v520 = vpack.c.bf16 %v256, %v250
    %v521 = vpack.c.bf16 %v257, %v251
    %v522 = vpack.c.bf16 %v258, %v252
    %v523 = vpack.c.bf16 %v265, %v259
    %v524 = vpack.c.bf16 %v266, %v260
    %v525 = vpack.c.bf16 %v267, %v261
    %v526 = vpack.c.bf16 %v268, %v262
    %v527 = vpack.c.bf16 %v269, %v263
    %v528 = vpack.c.bf16 %v270, %v264
    %v529 = vpack.c.bf16 %v277, %v271
    %v530 = vpack.c.bf16 %v278, %v272
    %v531 = vpack.c.bf16 %v279, %v273
    %v532 = vpack.c.bf16 %v280, %v274
    %v533 = vpack.c.bf16 %v281, %v275
    %v534 = vpack.c.bf16 %v282, %v276
    %v535 = vpack.c.bf16 %v289, %v283
    %v536 = vpack.c.bf16 %v290, %v284
    %v537 = vpack.c.bf16 %v291, %v285
    %v538 = vpack.c.bf16 %v292, %v286
    %v539 = vpack.c.bf16 %v293, %v287
    %v540 = vpack.c.bf16 %v294, %v288
    %v541 = vpack.c.bf16 %v301, %v295
    %v542 = vpack.c.bf16 %v302, %v296
    %v543 = vpack.c.bf16 %v303, %v297
    %v544 = vpack.c.bf16 %v304, %v298
    %v545 = vpack.c.bf16 %v305, %v299
    %v546 = vpack.c.bf16 %v306, %v300
    %v547 = vpack.c.bf16 %v309, %v307
    %v548 = vpack.c.bf16 %v310, %v308
    %v549 = vpack.c.bf16 %v313, %v311
    %v550 = vpack.c.bf16 %v314, %v312
    %v551 = vpack.c.bf16 %v317, %v315
    %v552 = vpack.c.bf16 %v318, %v316
    %v553 = vpack.c.bf16 %v321, %v319
    %v554 = vpack.c.bf16 %v322, %v320
    %v555 = vpack.c.bf16 %v325, %v323
    %v556 = vpack.c.bf16 %v326, %v324
    %v557 = vpack.c.bf16 %v329, %v327
    %v558 = vpack.c.bf16 %v330, %v328
    %v559 = vpack.c.bf16 %v333, %v331
    %v560 = vpack.c.bf16 %v334, %v332
    %v561 = vpack.c.bf16 %v337, %v335
    %v562 = vpack.c.bf16 %v338, %v336
    %v563 = vpack.c.bf16 %v341, %v339
    %v564 = vpack.c.bf16 %v342, %v340
    %v565 = vpack.c.bf16 %v345, %v343
    %v566 = vpack.c.bf16 %v346, %v344
    %v567 = vpack.c.bf16 %v349, %v347
    %v568 = vpack.c.bf16 %v350, %v348
    %v569 = vpack.c.bf16 %v353, %v351
    %v570 = vpack.c.bf16 %v354, %v352
    %v571 = vpack.c.bf16 %v357, %v355
    %v572 = vpack.c.bf16 %v358, %v356
    %v573 = vpack.c.bf16 %v361, %v359
    %v574 = vpack.c.bf16 %v362, %v360
    %v575 = vpack.c.bf16 %v365, %v363
    %v576 = vpack.c.bf16 %v366, %v364
    %v577 = vpack.c.bf16 %v369, %v367
    %v578 = vpack.c.bf16 %v370, %v368
    %v579 = vpack.c.bf16 %v373, %v371
    %v580 = vpack.c.bf16 %v374, %v372
    %v581 = vpack.c.bf16 %v377, %v375
    %v582 = vpack.c.bf16 %v378, %v376
    %v583 = vpack.c.bf16 %v381, %v379
    %v584 = vpack.c.bf16 %v382, %v380
    %v585 = vpack.c.bf16 %v385, %v383
    %v586 = vpack.c.bf16 %v386, %v384
    %v587 = vpack.c.bf16 %v389, %v387
    %v588 = vpack.c.bf16 %v390, %v388
    %v589 = vpack.c.bf16 %v393, %v391
    %v590 = vpack.c.bf16 %v394, %v392
    %v591 = vpack.c.bf16 %v397, %v395
    %v592 = vpack.c.bf16 %v398, %v396
    %v593 = vpack.c.bf16 %v401, %v399
    %v594 = vpack.c.bf16 %v402, %v400
    %v595 = vpack.c.bf16 %v405, %v403
    %v596 = vpack.c.bf16 %v406, %v404
    %v597 = vpack.c.bf16 %v409, %v407
    %v598 = vpack.c.bf16 %v410, %v408
    %v599 = vpack.c.bf16 %v413, %v411
    %v600 = vpack.c.bf16 %v414, %v412
    %v601 = vpack.c.bf16 %v417, %v415
    %v602 = vpack.c.bf16 %v418, %v416
    %v603 = vpack.c.bf16 %v421, %v419
    %v604 = vpack.c.bf16 %v422, %v420
    %v605 = vpack.c.bf16 %v425, %v423
    %v606 = vpack.c.bf16 %v426, %v424
    %v607 = vpack.c.bf16 %v429, %v427
    %v608 = vpack.c.bf16 %v430, %v428
    %v609 = vpack.c.bf16 %v433, %v431
    %v610 = vpack.c.bf16 %v434, %v432
    %v611 = vpack.c.bf16 %v437, %v435
    %v612 = vpack.c.bf16 %v438, %v436
    %v613 = vpack.c.bf16 %v441, %v439
    %v614 = vpack.c.bf16 %v442, %v440
    %v615 = vpack.c.bf16 %v445, %v443
    %v616 = vpack.c.bf16 %v446, %v444
    %v617 = vpack.c.bf16 %v449, %v447
    %v618 = vpack.c.bf16 %v450, %v448
    %v619 = vpack.c.bf16 %v453, %v451
    %v620 = vpack.c.bf16 %v454, %v452
    %v621 = vpack.c.bf16 %v457, %v455
    %v622 = vpack.c.bf16 %v458, %v456
    %v623 = vpack.c.bf16 %v461, %v459
    %v624 = vpack.c.bf16 %v462, %v460
    %v625 = vpack.c.bf16 %v465, %v463
    %v626 = vpack.c.bf16 %v466, %v464
    %v627 = vpack.c.bf16 %v469, %v467
    %v628 = vpack.c.bf16 %v470, %v468
    %v629 = vpack.c.bf16 %v473, %v471
    %v630 = vpack.c.bf16 %v474, %v472
    %v631 = vpack.c.bf16 %v477, %v475
    %v632 = vpack.c.bf16 %v478, %v476
    %v633 = vpack.c.bf16 %v481, %v479
    %v634 = vpack.c.bf16 %v482, %v480
    %v635 = vpack.c.bf16 %v485, %v483
    %v636 = vpack.c.bf16 %v486, %v484
    %v637 = vpack.c.bf16 %v489, %v487
    %v638 = vpack.c.bf16 %v490, %v488
    %v639 = vpack.c.bf16 %v493, %v491
    %v640 = vpack.c.bf16 %v494, %v492
    %v641 = vpack.c.bf16 %v497, %v495
    %v642 = vpack.c.bf16 %v498, %v496
    %643 = vmatpush.bf16.msra.mxu0 %v561
    %644 = vmatpush.bf16.msra.mxu0 %v559
    %645 = vmatpush.bf16.msra.mxu0 %v557
    %646 = vmatpush.bf16.msra.mxu0 %v555
    %647 = vmatpush.bf16.msra.mxu0 %v553
    %648 = vmatpush.bf16.msra.mxu0 %v551
    %649 = vmatpush.bf16.msra.mxu0 %v549
    %650 = vmatpush.bf16.msra.mxu0 %v547
    %651 = vmatmul.bf16.gmra.mxu0 %v499
    %v652 = vpop.f32.mrf.mxu0
    %v653 = vadd.f32 0.0, %v652
    %v654 = vpop.f32.mrf.mxu0
    %v655 = vadd.f32 0.0, %v654
    %656 = vmatmul.bf16.gmra.mxu0 %v505
    %v657 = vpop.f32.mrf.mxu0
    %v658 = vadd.f32 0.0, %v657
    %v659 = vpop.f32.mrf.mxu0
    %v660 = vadd.f32 0.0, %v659
    %661 = vmatmul.bf16.gmra.mxu0 %v511
    %v662 = vpop.f32.mrf.mxu0
    %v663 = vadd.f32 0.0, %v662
    %v664 = vpop.f32.mrf.mxu0
    %v665 = vadd.f32 0.0, %v664
    %666 = vmatmul.bf16.gmra.mxu0 %v517
    %v667 = vpop.f32.mrf.mxu0
    %v668 = vadd.f32 0.0, %v667
    %v669 = vpop.f32.mrf.mxu0
    %v670 = vadd.f32 0.0, %v669
    %671 = vmatmul.bf16.gmra.mxu0 %v523
    %v672 = vpop.f32.mrf.mxu0
    %v673 = vadd.f32 0.0, %v672
    %v674 = vpop.f32.mrf.mxu0
    %v675 = vadd.f32 0.0, %v674
    %676 = vmatmul.bf16.gmra.mxu0 %v529
    %v677 = vpop.f32.mrf.mxu0
    %v678 = vadd.f32 0.0, %v677
    %v679 = vpop.f32.mrf.mxu0
    %v680 = vadd.f32 0.0, %v679
    %681 = vmatmul.bf16.gmra.mxu0 %v535
    %v682 = vpop.f32.mrf.mxu0
    %v683 = vadd.f32 0.0, %v682
    %v684 = vpop.f32.mrf.mxu0
    %v685 = vadd.f32 0.0, %v684
    %686 = vmatmul.bf16.gmra.mxu0 %v541
    %v687 = vpop.f32.mrf.mxu0
    %v688 = vadd.f32 0.0, %v687
    %v689 = vpop.f32.mrf.mxu0
    %v690 = vadd.f32 0.0, %v689
    %691 = vdwg.mxu0
    %692 = vmatpush.bf16.msra.mxu0 %v577
    %693 = vmatpush.bf16.msra.mxu0 %v575
    %694 = vmatpush.bf16.msra.mxu0 %v573
    %695 = vmatpush.bf16.msra.mxu0 %v571
    %696 = vmatpush.bf16.msra.mxu0 %v569
    %697 = vmatpush.bf16.msra.mxu0 %v567
    %698 = vmatpush.bf16.msra.mxu0 %v565
    %699 = vmatpush.bf16.msra.mxu0 %v563
    %700 = vmatmul.bf16.gmra.mxu0 %v500
    %v701 = vpop.f32.mrf.mxu0
    %v702 = vadd.f32 %v653, %v701
    %v703 = vpop.f32.mrf.mxu0
    %v704 = vadd.f32 %v655, %v703
    %705 = vmatmul.bf16.gmra.mxu0 %v506
    %v706 = vpop.f32.mrf.mxu0
    %v707 = vadd.f32 %v658, %v706
    %v708 = vpop.f32.mrf.mxu0
    %v709 = vadd.f32 %v660, %v708
    %710 = vmatmul.bf16.gmra.mxu0 %v512
    %v711 = vpop.f32.mrf.mxu0
    %v712 = vadd.f32 %v663, %v711
    %v713 = vpop.f32.mrf.mxu0
    %v714 = vadd.f32 %v665, %v713
    %715 = vmatmul.bf16.gmra.mxu0 %v518
    %v716 = vpop.f32.mrf.mxu0
    %v717 = vadd.f32 %v668, %v716
    %v718 = vpop.f32.mrf.mxu0
    %v719 = vadd.f32 %v670, %v718
    %720 = vmatmul.bf16.gmra.mxu0 %v524
    %v721 = vpop.f32.mrf.mxu0
    %v722 = vadd.f32 %v673, %v721
    %v723 = vpop.f32.mrf.mxu0
    %v724 = vadd.f32 %v675, %v723
    %725 = vmatmul.bf16.gmra.mxu0 %v530
    %v726 = vpop.f32.mrf.mxu0
    %v727 = vadd.f32 %v678, %v726
    %v728 = vpop.f32.mrf.mxu0
    %v729 = vadd.f32 %v680, %v728
    %730 = vmatmul.bf16.gmra.mxu0 %v536
    %v731 = vpop.f32.mrf.mxu0
    %v732 = vadd.f32 %v683, %v731
    %v733 = vpop.f32.mrf.mxu0
    %v734 = vadd.f32 %v685, %v733
    %735 = vmatmul.bf16.gmra.mxu0 %v542
    %v736 = vpop.f32.mrf.mxu0
    %v737 = vadd.f32 %v688, %v736
    %v738 = vpop.f32.mrf.mxu0
    %v739 = vadd.f32 %v690, %v738
    %740 = vdwg.mxu0
    %741 = vmatpush.bf16.msra.mxu0 %v593
    %742 = vmatpush.bf16.msra.mxu0 %v591
    %743 = vmatpush.bf16.msra.mxu0 %v589
    %744 = vmatpush.bf16.msra.mxu0 %v587
    %745 = vmatpush.bf16.msra.mxu0 %v585
    %746 = vmatpush.bf16.msra.mxu0 %v583
    %747 = vmatpush.bf16.msra.mxu0 %v581
    %748 = vmatpush.bf16.msra.mxu0 %v579
    %749 = vmatmul.bf16.gmra.mxu0 %v501
    %v750 = vpop.f32.mrf.mxu0
    %v751 = vadd.f32 %v702, %v750
    %v752 = vpop.f32.mrf.mxu0
    %v753 = vadd.f32 %v704, %v752
    %754 = vmatmul.bf16.gmra.mxu0 %v507
    %v755 = vpop.f32.mrf.mxu0
    %v756 = vadd.f32 %v707, %v755
    %v757 = vpop.f32.mrf.mxu0
    %v758 = vadd.f32 %v709, %v757
    %759 = vmatmul.bf16.gmra.mxu0 %v513
    %v760 = vpop.f32.mrf.mxu0
    %v761 = vadd.f32 %v712, %v760
    %v762 = vpop.f32.mrf.mxu0
    %v763 = vadd.f32 %v714, %v762
    %764 = vmatmul.bf16.gmra.mxu0 %v519
    %v765 = vpop.f32.mrf.mxu0
    %v766 = vadd.f32 %v717, %v765
    %v767 = vpop.f32.mrf.mxu0
    %v768 = vadd.f32 %v719, %v767
    %769 = vmatmul.bf16.gmra.mxu0 %v525
    %v770 = vpop.f32.mrf.mxu0
    %v771 = vadd.f32 %v722, %v770
    %v772 = vpop.f32.mrf.mxu0
    %v773 = vadd.f32 %v724, %v772
    %774 = vmatmul.bf16.gmra.mxu0 %v531
    %v775 = vpop.f32.mrf.mxu0
    %v776 = vadd.f32 %v727, %v775
    %v777 = vpop.f32.mrf.mxu0
    %v778 = vadd.f32 %v729, %v777
    %779 = vmatmul.bf16.gmra.mxu0 %v537
    %v780 = vpop.f32.mrf.mxu0
    %v781 = vadd.f32 %v732, %v780
    %v782 = vpop.f32.mrf.mxu0
    %v783 = vadd.f32 %v734, %v782
    %784 = vmatmul.bf16.gmra.mxu0 %v543
    %v785 = vpop.f32.mrf.mxu0
    %v786 = vadd.f32 %v737, %v785
    %v787 = vpop.f32.mrf.mxu0
    %v788 = vadd.f32 %v739, %v787
    %789 = vdwg.mxu0
    %790 = vmatpush.bf16.msra.mxu0 %v609
    %791 = vmatpush.bf16.msra.mxu0 %v607
    %792 = vmatpush.bf16.msra.mxu0 %v605
    %793 = vmatpush.bf16.msra.mxu0 %v603
    %794 = vmatpush.bf16.msra.mxu0 %v601
    %795 = vmatpush.bf16.msra.mxu0 %v599
    %796 = vmatpush.bf16.msra.mxu0 %v597
    %797 = vmatpush.bf16.msra.mxu0 %v595
    %798 = vmatmul.bf16.gmra.mxu0 %v502
    %v799 = vpop.f32.mrf.mxu0
    %v800 = vadd.f32 %v751, %v799
    %v801 = vpop.f32.mrf.mxu0
    %v802 = vadd.f32 %v753, %v801
    %803 = vmatmul.bf16.gmra.mxu0 %v508
    %v804 = vpop.f32.mrf.mxu0
    %v805 = vadd.f32 %v756, %v804
    %v806 = vpop.f32.mrf.mxu0
    %v807 = vadd.f32 %v758, %v806
    %808 = vmatmul.bf16.gmra.mxu0 %v514
    %v809 = vpop.f32.mrf.mxu0
    %v810 = vadd.f32 %v761, %v809
    %v811 = vpop.f32.mrf.mxu0
    %v812 = vadd.f32 %v763, %v811
    %813 = vmatmul.bf16.gmra.mxu0 %v520
    %v814 = vpop.f32.mrf.mxu0
    %v815 = vadd.f32 %v766, %v814
    %v816 = vpop.f32.mrf.mxu0
    %v817 = vadd.f32 %v768, %v816
    %818 = vmatmul.bf16.gmra.mxu0 %v526
    %v819 = vpop.f32.mrf.mxu0
    %v820 = vadd.f32 %v771, %v819
    %v821 = vpop.f32.mrf.mxu0
    %v822 = vadd.f32 %v773, %v821
    %823 = vmatmul.bf16.gmra.mxu0 %v532
    %v824 = vpop.f32.mrf.mxu0
    %v825 = vadd.f32 %v776, %v824
    %v826 = vpop.f32.mrf.mxu0
    %v827 = vadd.f32 %v778, %v826
    %828 = vmatmul.bf16.gmra.mxu0 %v538
    %v829 = vpop.f32.mrf.mxu0
    %v830 = vadd.f32 %v781, %v829
    %v831 = vpop.f32.mrf.mxu0
    %v832 = vadd.f32 %v783, %v831
    %833 = vmatmul.bf16.gmra.mxu0 %v544
    %v834 = vpop.f32.mrf.mxu0
    %v835 = vadd.f32 %v786, %v834
    %v836 = vpop.f32.mrf.mxu0
    %v837 = vadd.f32 %v788, %v836
    %838 = vdwg.mxu0
    %839 = vmatpush.bf16.msra.mxu0 %v625
    %840 = vmatpush.bf16.msra.mxu0 %v623
    %841 = vmatpush.bf16.msra.mxu0 %v621
    %842 = vmatpush.bf16.msra.mxu0 %v619
    %843 = vmatpush.bf16.msra.mxu0 %v617
    %844 = vmatpush.bf16.msra.mxu0 %v615
    %845 = vmatpush.bf16.msra.mxu0 %v613
    %846 = vmatpush.bf16.msra.mxu0 %v611
    %847 = vmatmul.bf16.gmra.mxu0 %v503
    %v848 = vpop.f32.mrf.mxu0
    %v849 = vadd.f32 %v800, %v848
    %v850 = vpop.f32.mrf.mxu0
    %v851 = vadd.f32 %v802, %v850
    %852 = vmatmul.bf16.gmra.mxu0 %v509
    %v853 = vpop.f32.mrf.mxu0
    %v854 = vadd.f32 %v805, %v853
    %v855 = vpop.f32.mrf.mxu0
    %v856 = vadd.f32 %v807, %v855
    %857 = vmatmul.bf16.gmra.mxu0 %v515
    %v858 = vpop.f32.mrf.mxu0
    %v859 = vadd.f32 %v810, %v858
    %v860 = vpop.f32.mrf.mxu0
    %v861 = vadd.f32 %v812, %v860
    %862 = vmatmul.bf16.gmra.mxu0 %v521
    %v863 = vpop.f32.mrf.mxu0
    %v864 = vadd.f32 %v815, %v863
    %v865 = vpop.f32.mrf.mxu0
    %v866 = vadd.f32 %v817, %v865
    %867 = vmatmul.bf16.gmra.mxu0 %v527
    %v868 = vpop.f32.mrf.mxu0
    %v869 = vadd.f32 %v820, %v868
    %v870 = vpop.f32.mrf.mxu0
    %v871 = vadd.f32 %v822, %v870
    %872 = vmatmul.bf16.gmra.mxu0 %v533
    %v873 = vpop.f32.mrf.mxu0
    %v874 = vadd.f32 %v825, %v873
    %v875 = vpop.f32.mrf.mxu0
    %v876 = vadd.f32 %v827, %v875
    %877 = vmatmul.bf16.gmra.mxu0 %v539
    %v878 = vpop.f32.mrf.mxu0
    %v879 = vadd.f32 %v830, %v878
    %v880 = vpop.f32.mrf.mxu0
    %v881 = vadd.f32 %v832, %v880
    %882 = vmatmul.bf16.gmra.mxu0 %v545
    %v883 = vpop.f32.mrf.mxu0
    %v884 = vadd.f32 %v835, %v883
    %v885 = vpop.f32.mrf.mxu0
    %v886 = vadd.f32 %v837, %v885
    %887 = vdwg.mxu0
    %888 = vmatpush.bf16.msra.mxu0 %v641
    %889 = vmatpush.bf16.msra.mxu0 %v639
    %890 = vmatpush.bf16.msra.mxu0 %v637
    %891 = vmatpush.bf16.msra.mxu0 %v635
    %892 = vmatpush.bf16.msra.mxu0 %v633
    %893 = vmatpush.bf16.msra.mxu0 %v631
    %894 = vmatpush.bf16.msra.mxu0 %v629
    %895 = vmatpush.bf16.msra.mxu0 %v627
    %896 = vmatmul.bf16.gmra.mxu0 %v504
    %v897 = vpop.f32.mrf.mxu0
    %v898 = vadd.f32 %v849, %v897
    %v899 = vpop.f32.mrf.mxu0
    %v900 = vadd.f32 %v851, %v899
    %901 = vmatmul.bf16.gmra.mxu0 %v510
    %v902 = vpop.f32.mrf.mxu0
    %v903 = vadd.f32 %v854, %v902
    %v904 = vpop.f32.mrf.mxu0
    %v905 = vadd.f32 %v856, %v904
    %906 = vmatmul.bf16.gmra.mxu0 %v516
    %v907 = vpop.f32.mrf.mxu0
    %v908 = vadd.f32 %v859, %v907
    %v909 = vpop.f32.mrf.mxu0
    %v910 = vadd.f32 %v861, %v909
    %911 = vmatmul.bf16.gmra.mxu0 %v522
    %v912 = vpop.f32.mrf.mxu0
    %v913 = vadd.f32 %v864, %v912
    %v914 = vpop.f32.mrf.mxu0
    %v915 = vadd.f32 %v866, %v914
    %916 = vmatmul.bf16.gmra.mxu0 %v528
    %v917 = vpop.f32.mrf.mxu0
    %v918 = vadd.f32 %v869, %v917
    %v919 = vpop.f32.mrf.mxu0
    %v920 = vadd.f32 %v871, %v919
    %921 = vmatmul.bf16.gmra.mxu0 %v534
    %v922 = vpop.f32.mrf.mxu0
    %v923 = vadd.f32 %v874, %v922
    %v924 = vpop.f32.mrf.mxu0
    %v925 = vadd.f32 %v876, %v924
    %926 = vmatmul.bf16.gmra.mxu0 %v540
    %v927 = vpop.f32.mrf.mxu0
    %v928 = vadd.f32 %v879, %v927
    %v929 = vpop.f32.mrf.mxu0
    %v930 = vadd.f32 %v881, %v929
    %931 = vmatmul.bf16.gmra.mxu0 %v546
    %v932 = vpop.f32.mrf.mxu0
    %v933 = vadd.f32 %v884, %v932
    %v934 = vpop.f32.mrf.mxu0
    %v935 = vadd.f32 %v886, %v934
    %936 = vdwg.mxu0
    %937 = vmatpush.bf16.msra.mxu0 %v562
    %938 = vmatpush.bf16.msra.mxu0 %v560
    %939 = vmatpush.bf16.msra.mxu0 %v558
    %940 = vmatpush.bf16.msra.mxu0 %v556
    %941 = vmatpush.bf16.msra.mxu0 %v554
    %942 = vmatpush.bf16.msra.mxu0 %v552
    %943 = vmatpush.bf16.msra.mxu0 %v550
    %944 = vmatpush.bf16.msra.mxu0 %v548
    %945 = vmatmul.bf16.gmra.mxu0 %v499
    %v946 = vpop.f32.mrf.mxu0
    %v947 = vadd.f32 0.0, %v946
    %v948 = vpop.f32.mrf.mxu0
    %v949 = vadd.f32 0.0, %v948
    %950 = vmatmul.bf16.gmra.mxu0 %v505
    %v951 = vpop.f32.mrf.mxu0
    %v952 = vadd.f32 0.0, %v951
    %v953 = vpop.f32.mrf.mxu0
    %v954 = vadd.f32 0.0, %v953
    %955 = vmatmul.bf16.gmra.mxu0 %v511
    %v956 = vpop.f32.mrf.mxu0
    %v957 = vadd.f32 0.0, %v956
    %v958 = vpop.f32.mrf.mxu0
    %v959 = vadd.f32 0.0, %v958
    %960 = vmatmul.bf16.gmra.mxu0 %v517
    %v961 = vpop.f32.mrf.mxu0
    %v962 = vadd.f32 0.0, %v961
    %v963 = vpop.f32.mrf.mxu0
    %v964 = vadd.f32 0.0, %v963
    %965 = vmatmul.bf16.gmra.mxu0 %v523
    %v966 = vpop.f32.mrf.mxu0
    %v967 = vadd.f32 0.0, %v966
    %v968 = vpop.f32.mrf.mxu0
    %v969 = vadd.f32 0.0, %v968
    %970 = vmatmul.bf16.gmra.mxu0 %v529
    %v971 = vpop.f32.mrf.mxu0
    %v972 = vadd.f32 0.0, %v971
    %v973 = vpop.f32.mrf.mxu0
    %v974 = vadd.f32 0.0, %v973
    %975 = vmatmul.bf16.gmra.mxu0 %v535
    %v976 = vpop.f32.mrf.mxu0
    %v977 = vadd.f32 0.0, %v976
    %v978 = vpop.f32.mrf.mxu0
    %v979 = vadd.f32 0.0, %v978
    %980 = vmatmul.bf16.gmra.mxu0 %v541
    %v981 = vpop.f32.mrf.mxu0
    %v982 = vadd.f32 0.0, %v981
    %v983 = vpop.f32.mrf.mxu0
    %v984 = vadd.f32 0.0, %v983
    %985 = vdwg.mxu0
    %986 = vmatpush.bf16.msra.mxu0 %v578
    %987 = vmatpush.bf16.msra.mxu0 %v576
    %988 = vmatpush.bf16.msra.mxu0 %v574
    %989 = vmatpush.bf16.msra.mxu0 %v572
    %990 = vmatpush.bf16.msra.mxu0 %v570
    %991 = vmatpush.bf16.msra.mxu0 %v568
    %992 = vmatpush.bf16.msra.mxu0 %v566
    %993 = vmatpush.bf16.msra.mxu0 %v564
    %994 = vmatmul.bf16.gmra.mxu0 %v500
    %v995 = vpop.f32.mrf.mxu0
    %v996 = vadd.f32 %v947, %v995
    %v997 = vpop.f32.mrf.mxu0
    %v998 = vadd.f32 %v949, %v997
    %999 = vmatmul.bf16.gmra.mxu0 %v506
    %v1000 = vpop.f32.mrf.mxu0
    %v1001 = vadd.f32 %v952, %v1000
    %v1002 = vpop.f32.mrf.mxu0
    %v1003 = vadd.f32 %v954, %v1002
    %1004 = vmatmul.bf16.gmra.mxu0 %v512
    %v1005 = vpop.f32.mrf.mxu0
    %v1006 = vadd.f32 %v957, %v1005
    %v1007 = vpop.f32.mrf.mxu0
    %v1008 = vadd.f32 %v959, %v1007
    %1009 = vmatmul.bf16.gmra.mxu0 %v518
    %v1010 = vpop.f32.mrf.mxu0
    %v1011 = vadd.f32 %v962, %v1010
    %v1012 = vpop.f32.mrf.mxu0
    %v1013 = vadd.f32 %v964, %v1012
    %1014 = vmatmul.bf16.gmra.mxu0 %v524
    %v1015 = vpop.f32.mrf.mxu0
    %v1016 = vadd.f32 %v967, %v1015
    %v1017 = vpop.f32.mrf.mxu0
    %v1018 = vadd.f32 %v969, %v1017
    %1019 = vmatmul.bf16.gmra.mxu0 %v530
    %v1020 = vpop.f32.mrf.mxu0
    %v1021 = vadd.f32 %v972, %v1020
    %v1022 = vpop.f32.mrf.mxu0
    %v1023 = vadd.f32 %v974, %v1022
    %1024 = vmatmul.bf16.gmra.mxu0 %v536
    %v1025 = vpop.f32.mrf.mxu0
    %v1026 = vadd.f32 %v977, %v1025
    %v1027 = vpop.f32.mrf.mxu0
    %v1028 = vadd.f32 %v979, %v1027
    %1029 = vmatmul.bf16.gmra.mxu0 %v542
    %v1030 = vpop.f32.mrf.mxu0
    %v1031 = vadd.f32 %v982, %v1030
    %v1032 = vpop.f32.mrf.mxu0
    %v1033 = vadd.f32 %v984, %v1032
    %1034 = vdwg.mxu0
    %1035 = vmatpush.bf16.msra.mxu0 %v594
    %1036 = vmatpush.bf16.msra.mxu0 %v592
    %1037 = vmatpush.bf16.msra.mxu0 %v590
    %1038 = vmatpush.bf16.msra.mxu0 %v588
    %1039 = vmatpush.bf16.msra.mxu0 %v586
    %1040 = vmatpush.bf16.msra.mxu0 %v584
    %1041 = vmatpush.bf16.msra.mxu0 %v582
    %1042 = vmatpush.bf16.msra.mxu0 %v580
    %1043 = vmatmul.bf16.gmra.mxu0 %v501
    %v1044 = vpop.f32.mrf.mxu0
    %v1045 = vadd.f32 %v996, %v1044
    %v1046 = vpop.f32.mrf.mxu0
    %v1047 = vadd.f32 %v998, %v1046
    %1048 = vmatmul.bf16.gmra.mxu0 %v507
    %v1049 = vpop.f32.mrf.mxu0
    %v1050 = vadd.f32 %v1001, %v1049
    %v1051 = vpop.f32.mrf.mxu0
    %v1052 = vadd.f32 %v1003, %v1051
    %1053 = vmatmul.bf16.gmra.mxu0 %v513
    %v1054 = vpop.f32.mrf.mxu0
    %v1055 = vadd.f32 %v1006, %v1054
    %v1056 = vpop.f32.mrf.mxu0
    %v1057 = vadd.f32 %v1008, %v1056
    %1058 = vmatmul.bf16.gmra.mxu0 %v519
    %v1059 = vpop.f32.mrf.mxu0
    %v1060 = vadd.f32 %v1011, %v1059
    %v1061 = vpop.f32.mrf.mxu0
    %v1062 = vadd.f32 %v1013, %v1061
    %1063 = vmatmul.bf16.gmra.mxu0 %v525
    %v1064 = vpop.f32.mrf.mxu0
    %v1065 = vadd.f32 %v1016, %v1064
    %v1066 = vpop.f32.mrf.mxu0
    %v1067 = vadd.f32 %v1018, %v1066
    %1068 = vmatmul.bf16.gmra.mxu0 %v531
    %v1069 = vpop.f32.mrf.mxu0
    %v1070 = vadd.f32 %v1021, %v1069
    %v1071 = vpop.f32.mrf.mxu0
    %v1072 = vadd.f32 %v1023, %v1071
    %1073 = vmatmul.bf16.gmra.mxu0 %v537
    %v1074 = vpop.f32.mrf.mxu0
    %v1075 = vadd.f32 %v1026, %v1074
    %v1076 = vpop.f32.mrf.mxu0
    %v1077 = vadd.f32 %v1028, %v1076
    %1078 = vmatmul.bf16.gmra.mxu0 %v543
    %v1079 = vpop.f32.mrf.mxu0
    %v1080 = vadd.f32 %v1031, %v1079
    %v1081 = vpop.f32.mrf.mxu0
    %v1082 = vadd.f32 %v1033, %v1081
    %1083 = vdwg.mxu0
    %1084 = vmatpush.bf16.msra.mxu0 %v610
    %1085 = vmatpush.bf16.msra.mxu0 %v608
    %1086 = vmatpush.bf16.msra.mxu0 %v606
    %1087 = vmatpush.bf16.msra.mxu0 %v604
    %1088 = vmatpush.bf16.msra.mxu0 %v602
    %1089 = vmatpush.bf16.msra.mxu0 %v600
    %1090 = vmatpush.bf16.msra.mxu0 %v598
    %1091 = vmatpush.bf16.msra.mxu0 %v596
    %1092 = vmatmul.bf16.gmra.mxu0 %v502
    %v1093 = vpop.f32.mrf.mxu0
    %v1094 = vadd.f32 %v1045, %v1093
    %v1095 = vpop.f32.mrf.mxu0
    %v1096 = vadd.f32 %v1047, %v1095
    %1097 = vmatmul.bf16.gmra.mxu0 %v508
    %v1098 = vpop.f32.mrf.mxu0
    %v1099 = vadd.f32 %v1050, %v1098
    %v1100 = vpop.f32.mrf.mxu0
    %v1101 = vadd.f32 %v1052, %v1100
    %1102 = vmatmul.bf16.gmra.mxu0 %v514
    %v1103 = vpop.f32.mrf.mxu0
    %v1104 = vadd.f32 %v1055, %v1103
    %v1105 = vpop.f32.mrf.mxu0
    %v1106 = vadd.f32 %v1057, %v1105
    %1107 = vmatmul.bf16.gmra.mxu0 %v520
    %v1108 = vpop.f32.mrf.mxu0
    %v1109 = vadd.f32 %v1060, %v1108
    %v1110 = vpop.f32.mrf.mxu0
    %v1111 = vadd.f32 %v1062, %v1110
    %1112 = vmatmul.bf16.gmra.mxu0 %v526
    %v1113 = vpop.f32.mrf.mxu0
    %v1114 = vadd.f32 %v1065, %v1113
    %v1115 = vpop.f32.mrf.mxu0
    %v1116 = vadd.f32 %v1067, %v1115
    %1117 = vmatmul.bf16.gmra.mxu0 %v532
    %v1118 = vpop.f32.mrf.mxu0
    %v1119 = vadd.f32 %v1070, %v1118
    %v1120 = vpop.f32.mrf.mxu0
    %v1121 = vadd.f32 %v1072, %v1120
    %1122 = vmatmul.bf16.gmra.mxu0 %v538
    %v1123 = vpop.f32.mrf.mxu0
    %v1124 = vadd.f32 %v1075, %v1123
    %v1125 = vpop.f32.mrf.mxu0
    %v1126 = vadd.f32 %v1077, %v1125
    %1127 = vmatmul.bf16.gmra.mxu0 %v544
    %v1128 = vpop.f32.mrf.mxu0
    %v1129 = vadd.f32 %v1080, %v1128
    %v1130 = vpop.f32.mrf.mxu0
    %v1131 = vadd.f32 %v1082, %v1130
    %1132 = vdwg.mxu0
    %1133 = vmatpush.bf16.msra.mxu0 %v626
    %1134 = vmatpush.bf16.msra.mxu0 %v624
    %1135 = vmatpush.bf16.msra.mxu0 %v622
    %1136 = vmatpush.bf16.msra.mxu0 %v620
    %1137 = vmatpush.bf16.msra.mxu0 %v618
    %1138 = vmatpush.bf16.msra.mxu0 %v616
    %1139 = vmatpush.bf16.msra.mxu0 %v614
    %1140 = vmatpush.bf16.msra.mxu0 %v612
    %1141 = vmatmul.bf16.gmra.mxu0 %v503
    %v1142 = vpop.f32.mrf.mxu0
    %v1143 = vadd.f32 %v1094, %v1142
    %v1144 = vpop.f32.mrf.mxu0
    %v1145 = vadd.f32 %v1096, %v1144
    %1146 = vmatmul.bf16.gmra.mxu0 %v509
    %v1147 = vpop.f32.mrf.mxu0
    %v1148 = vadd.f32 %v1099, %v1147
    %v1149 = vpop.f32.mrf.mxu0
    %v1150 = vadd.f32 %v1101, %v1149
    %1151 = vmatmul.bf16.gmra.mxu0 %v515
    %v1152 = vpop.f32.mrf.mxu0
    %v1153 = vadd.f32 %v1104, %v1152
    %v1154 = vpop.f32.mrf.mxu0
    %v1155 = vadd.f32 %v1106, %v1154
    %1156 = vmatmul.bf16.gmra.mxu0 %v521
    %v1157 = vpop.f32.mrf.mxu0
    %v1158 = vadd.f32 %v1109, %v1157
    %v1159 = vpop.f32.mrf.mxu0
    %v1160 = vadd.f32 %v1111, %v1159
    %1161 = vmatmul.bf16.gmra.mxu0 %v527
    %v1162 = vpop.f32.mrf.mxu0
    %v1163 = vadd.f32 %v1114, %v1162
    %v1164 = vpop.f32.mrf.mxu0
    %v1165 = vadd.f32 %v1116, %v1164
    %1166 = vmatmul.bf16.gmra.mxu0 %v533
    %v1167 = vpop.f32.mrf.mxu0
    %v1168 = vadd.f32 %v1119, %v1167
    %v1169 = vpop.f32.mrf.mxu0
    %v1170 = vadd.f32 %v1121, %v1169
    %1171 = vmatmul.bf16.gmra.mxu0 %v539
    %v1172 = vpop.f32.mrf.mxu0
    %v1173 = vadd.f32 %v1124, %v1172
    %v1174 = vpop.f32.mrf.mxu0
    %v1175 = vadd.f32 %v1126, %v1174
    %1176 = vmatmul.bf16.gmra.mxu0 %v545
    %v1177 = vpop.f32.mrf.mxu0
    %v1178 = vadd.f32 %v1129, %v1177
    %v1179 = vpop.f32.mrf.mxu0
    %v1180 = vadd.f32 %v1131, %v1179
    %1181 = vdwg.mxu0
    %1182 = vmatpush.bf16.msra.mxu0 %v642
    %1183 = vmatpush.bf16.msra.mxu0 %v640
    %1184 = vmatpush.bf16.msra.mxu0 %v638
    %1185 = vmatpush.bf16.msra.mxu0 %v636
    %1186 = vmatpush.bf16.msra.mxu0 %v634
    %1187 = vmatpush.bf16.msra.mxu0 %v632
    %1188 = vmatpush.bf16.msra.mxu0 %v630
    %1189 = vmatpush.bf16.msra.mxu0 %v628
    %1190 = vmatmul.bf16.gmra.mxu0 %v504
    %v1191 = vpop.f32.mrf.mxu0
    %v1192 = vadd.f32 %v1143, %v1191
    %v1193 = vpop.f32.mrf.mxu0
    %v1194 = vadd.f32 %v1145, %v1193
    %1195 = vmatmul.bf16.gmra.mxu0 %v510
    %v1196 = vpop.f32.mrf.mxu0
    %v1197 = vadd.f32 %v1148, %v1196
    %v1198 = vpop.f32.mrf.mxu0
    %v1199 = vadd.f32 %v1150, %v1198
    %1200 = vmatmul.bf16.gmra.mxu0 %v516
    %v1201 = vpop.f32.mrf.mxu0
    %v1202 = vadd.f32 %v1153, %v1201
    %v1203 = vpop.f32.mrf.mxu0
    %v1204 = vadd.f32 %v1155, %v1203
    %1205 = vmatmul.bf16.gmra.mxu0 %v522
    %v1206 = vpop.f32.mrf.mxu0
    %v1207 = vadd.f32 %v1158, %v1206
    %v1208 = vpop.f32.mrf.mxu0
    %v1209 = vadd.f32 %v1160, %v1208
    %1210 = vmatmul.bf16.gmra.mxu0 %v528
    %v1211 = vpop.f32.mrf.mxu0
    %v1212 = vadd.f32 %v1163, %v1211
    %v1213 = vpop.f32.mrf.mxu0
    %v1214 = vadd.f32 %v1165, %v1213
    %1215 = vmatmul.bf16.gmra.mxu0 %v534
    %v1216 = vpop.f32.mrf.mxu0
    %v1217 = vadd.f32 %v1168, %v1216
    %v1218 = vpop.f32.mrf.mxu0
    %v1219 = vadd.f32 %v1170, %v1218
    %1220 = vmatmul.bf16.gmra.mxu0 %v540
    %v1221 = vpop.f32.mrf.mxu0
    %v1222 = vadd.f32 %v1173, %v1221
    %v1223 = vpop.f32.mrf.mxu0
    %v1224 = vadd.f32 %v1175, %v1223
    %1225 = vmatmul.bf16.gmra.mxu0 %v546
    %v1226 = vpop.f32.mrf.mxu0
    %v1227 = vadd.f32 %v1178, %v1226
    %v1228 = vpop.f32.mrf.mxu0
    %v1229 = vadd.f32 %v1180, %v1228
    %1230 = vdwg.mxu0
    %v1231 = vadd.f32 %v898, %v1192
    %1232 = vadd.xlane.f32.xlu0 %v1231
    %v1233 = vpop.xlane.xlu0 %1232
    %v1234 = vadd.f32 %v900, %v1194
    %1235 = vadd.xlane.f32.xlu0 %v1234
    %v1236 = vpop.xlane.xlu0 %1235
    %v1237 = vadd.f32 %v903, %v1197
    %1238 = vadd.xlane.f32.xlu0 %v1237
    %v1239 = vpop.xlane.xlu0 %1238
    %v1240 = vadd.f32 %v905, %v1199
    %1241 = vadd.xlane.f32.xlu0 %v1240
    %v1242 = vpop.xlane.xlu0 %1241
    %v1243 = vadd.f32 %v908, %v1202
    %1244 = vadd.xlane.f32.xlu0 %v1243
    %v1245 = vpop.xlane.xlu0 %1244
    %v1246 = vadd.f32 %v910, %v1204
    %1247 = vadd.xlane.f32.xlu0 %v1246
    %v1248 = vpop.xlane.xlu0 %1247
    %v1249 = vadd.f32 %v913, %v1207
    %1250 = vadd.xlane.f32.xlu0 %v1249
    %v1251 = vpop.xlane.xlu0 %1250
    %v1252 = vadd.f32 %v915, %v1209
    %1253 = vadd.xlane.f32.xlu0 %v1252
    %v1254 = vpop.xlane.xlu0 %1253
    %v1255 = vadd.f32 %v918, %v1212
    %1256 = vadd.xlane.f32.xlu0 %v1255
    %v1257 = vpop.xlane.xlu0 %1256
    %v1258 = vadd.f32 %v920, %v1214
    %1259 = vadd.xlane.f32.xlu0 %v1258
    %v1260 = vpop.xlane.xlu0 %1259
    %v1261 = vadd.f32 %v923, %v1217
    %1262 = vadd.xlane.f32.xlu0 %v1261
    %v1263 = vpop.xlane.xlu0 %1262
    %v1264 = vadd.f32 %v925, %v1219
    %1265 = vadd.xlane.f32.xlu0 %v1264
    %v1266 = vpop.xlane.xlu0 %1265
    %v1267 = vadd.f32 %v928, %v1222
    %1268 = vadd.xlane.f32.xlu0 %v1267
    %v1269 = vpop.xlane.xlu0 %1268
    %v1270 = vadd.f32 %v930, %v1224
    %1271 = vadd.xlane.f32.xlu0 %v1270
    %v1272 = vpop.xlane.xlu0 %1271
    %v1273 = vadd.f32 %v933, %v1227
    %1274 = vadd.xlane.f32.xlu0 %v1273
    %v1275 = vpop.xlane.xlu0 %1274
    %v1276 = vadd.f32 %v935, %v1229
    %1277 = vadd.xlane.f32.xlu0 %v1276
    %v1278 = vpop.xlane.xlu0 %1277
    %v1279 = vmul.f32 %v898, %v898
    %v1280 = vmul.f32 %v1192, %v1192
    %v1281 = vmul.f32 %v900, %v900
    %v1282 = vmul.f32 %v1194, %v1194
    %v1283 = vmul.f32 %v903, %v903
    %v1284 = vmul.f32 %v1197, %v1197
    %v1285 = vmul.f32 %v905, %v905
    %v1286 = vmul.f32 %v1199, %v1199
    %v1287 = vmul.f32 %v908, %v908
    %v1288 = vmul.f32 %v1202, %v1202
    %v1289 = vmul.f32 %v910, %v910
    %v1290 = vmul.f32 %v1204, %v1204
    %v1291 = vmul.f32 %v913, %v913
    %v1292 = vmul.f32 %v1207, %v1207
    %v1293 = vmul.f32 %v915, %v915
    %v1294 = vmul.f32 %v1209, %v1209
    %v1295 = vmul.f32 %v918, %v918
    %v1296 = vmul.f32 %v1212, %v1212
    %v1297 = vmul.f32 %v920, %v920
    %v1298 = vmul.f32 %v1214, %v1214
    %v1299 = vmul.f32 %v923, %v923
    %v1300 = vmul.f32 %v1217, %v1217
    %v1301 = vmul.f32 %v925, %v925
    %v1302 = vmul.f32 %v1219, %v1219
    %v1303 = vmul.f32 %v928, %v928
    %v1304 = vmul.f32 %v1222, %v1222
    %v1305 = vmul.f32 %v930, %v930
    %v1306 = vmul.f32 %v1224, %v1224
    %v1307 = vmul.f32 %v933, %v933
    %v1308 = vmul.f32 %v1227, %v1227
    %v1309 = vmul.f32 %v935, %v935
    %v1310 = vmul.f32 %v1229, %v1229
    %v1311 = vadd.f32 %v1279, %v1280
    %1312 = vadd.xlane.f32.xlu0 %v1311
    %v1313 = vpop.xlane.xlu0 %1312
    %v1314 = vadd.f32 %v1281, %v1282
    %1315 = vadd.xlane.f32.xlu0 %v1314
    %v1316 = vpop.xlane.xlu0 %1315
    %v1317 = vadd.f32 %v1283, %v1284
    %1318 = vadd.xlane.f32.xlu0 %v1317
    %v1319 = vpop.xlane.xlu0 %1318
    %v1320 = vadd.f32 %v1285, %v1286
    %1321 = vadd.xlane.f32.xlu0 %v1320
    %v1322 = vpop.xlane.xlu0 %1321
    %v1323 = vadd.f32 %v1287, %v1288
    %1324 = vadd.xlane.f32.xlu0 %v1323
    %v1325 = vpop.xlane.xlu0 %1324
    %v1326 = vadd.f32 %v1289, %v1290
    %1327 = vadd.xlane.f32.xlu0 %v1326
    %v1328 = vpop.xlane.xlu0 %1327
    %v1329 = vadd.f32 %v1291, %v1292
    %1330 = vadd.xlane.f32.xlu0 %v1329
    %v1331 = vpop.xlane.xlu0 %1330
    %v1332 = vadd.f32 %v1293, %v1294
    %1333 = vadd.xlane.f32.xlu0 %v1332
    %v1334 = vpop.xlane.xlu0 %1333
    %v1335 = vadd.f32 %v1295, %v1296
    %1336 = vadd.xlane.f32.xlu0 %v1335
    %v1337 = vpop.xlane.xlu0 %1336
    %v1338 = vadd.f32 %v1297, %v1298
    %1339 = vadd.xlane.f32.xlu0 %v1338
    %v1340 = vpop.xlane.xlu0 %1339
    %v1341 = vadd.f32 %v1299, %v1300
    %1342 = vadd.xlane.f32.xlu0 %v1341
    %v1343 = vpop.xlane.xlu0 %1342
    %v1344 = vadd.f32 %v1301, %v1302
    %1345 = vadd.xlane.f32.xlu0 %v1344
    %v1346 = vpop.xlane.xlu0 %1345
    %v1347 = vadd.f32 %v1303, %v1304
    %1348 = vadd.xlane.f32.xlu0 %v1347
    %v1349 = vpop.xlane.xlu0 %1348
    %v1350 = vadd.f32 %v1305, %v1306
    %1351 = vadd.xlane.f32.xlu0 %v1350
    %v1352 = vpop.xlane.xlu0 %1351
    %v1353 = vadd.f32 %v1307, %v1308
    %1354 = vadd.xlane.f32.xlu0 %v1353
    %v1355 = vpop.xlane.xlu0 %1354
    %v1356 = vadd.f32 %v1309, %v1310
    %1357 = vadd.xlane.f32.xlu0 %v1356
    %v1358 = vpop.xlane.xlu0 %1357
    %v1359 = vmul.f32 %v1233, 0.0051020407
    %v1360 = vmul.f32 %v1236, 0.0051020407
    %v1361 = vmul.f32 %v1239, 0.0051020407
    %v1362 = vmul.f32 %v1242, 0.0051020407
    %v1363 = vmul.f32 %v1245, 0.0051020407
    %v1364 = vmul.f32 %v1248, 0.0051020407
    %v1365 = vmul.f32 %v1251, 0.0051020407
    %v1366 = vmul.f32 %v1254, 0.0051020407
    %v1367 = vmul.f32 %v1257, 0.0051020407
    %v1368 = vmul.f32 %v1260, 0.0051020407
    %v1369 = vmul.f32 %v1263, 0.0051020407
    %v1370 = vmul.f32 %v1266, 0.0051020407
    %v1371 = vmul.f32 %v1269, 0.0051020407
    %v1372 = vmul.f32 %v1272, 0.0051020407
    %v1373 = vmul.f32 %v1275, 0.0051020407
    %v1374 = vmul.f32 %v1278, 0.0051020407
    %v1375 = vmul.f32 %v1313, 0.0051020407
    %v1376 = vmul.f32 %v1316, 0.0051020407
    %v1377 = vmul.f32 %v1319, 0.0051020407
    %v1378 = vmul.f32 %v1322, 0.0051020407
    %v1379 = vmul.f32 %v1325, 0.0051020407
    %v1380 = vmul.f32 %v1328, 0.0051020407
    %v1381 = vmul.f32 %v1331, 0.0051020407
    %v1382 = vmul.f32 %v1334, 0.0051020407
    %v1383 = vmul.f32 %v1337, 0.0051020407
    %v1384 = vmul.f32 %v1340, 0.0051020407
    %v1385 = vmul.f32 %v1343, 0.0051020407
    %v1386 = vmul.f32 %v1346, 0.0051020407
    %v1387 = vmul.f32 %v1349, 0.0051020407
    %v1388 = vmul.f32 %v1352, 0.0051020407
    %v1389 = vmul.f32 %v1355, 0.0051020407
    %v1390 = vmul.f32 %v1358, 0.0051020407
    %v1391 = vmul.f32 %v1359, %v1359
    %v1392 = vmul.f32 %v1360, %v1360
    %v1393 = vmul.f32 %v1361, %v1361
    %v1394 = vmul.f32 %v1362, %v1362
    %v1395 = vmul.f32 %v1363, %v1363
    %v1396 = vmul.f32 %v1364, %v1364
    %v1397 = vmul.f32 %v1365, %v1365
    %v1398 = vmul.f32 %v1366, %v1366
    %v1399 = vmul.f32 %v1367, %v1367
    %v1400 = vmul.f32 %v1368, %v1368
    %v1401 = vmul.f32 %v1369, %v1369
    %v1402 = vmul.f32 %v1370, %v1370
    %v1403 = vmul.f32 %v1371, %v1371
    %v1404 = vmul.f32 %v1372, %v1372
    %v1405 = vmul.f32 %v1373, %v1373
    %v1406 = vmul.f32 %v1374, %v1374
    %v1407 = vsub.f32 %v1375, %v1391
    %v1408 = vsub.f32 %v1376, %v1392
    %v1409 = vsub.f32 %v1377, %v1393
    %v1410 = vsub.f32 %v1378, %v1394
    %v1411 = vsub.f32 %v1379, %v1395
    %v1412 = vsub.f32 %v1380, %v1396
    %v1413 = vsub.f32 %v1381, %v1397
    %v1414 = vsub.f32 %v1382, %v1398
    %v1415 = vsub.f32 %v1383, %v1399
    %v1416 = vsub.f32 %v1384, %v1400
    %v1417 = vsub.f32 %v1385, %v1401
    %v1418 = vsub.f32 %v1386, %v1402
    %v1419 = vsub.f32 %v1387, %v1403
    %v1420 = vsub.f32 %v1388, %v1404
    %v1421 = vsub.f32 %v1389, %v1405
    %v1422 = vsub.f32 %v1390, %v1406
    %v1423 = vmax.f32 %v1407, 0.0
    %v1424 = vmax.f32 %v1408, 0.0
    %v1425 = vmax.f32 %v1409, 0.0
    %v1426 = vmax.f32 %v1410, 0.0
    %v1427 = vmax.f32 %v1411, 0.0
    %v1428 = vmax.f32 %v1412, 0.0
    %v1429 = vmax.f32 %v1413, 0.0
    %v1430 = vmax.f32 %v1414, 0.0
    %v1431 = vmax.f32 %v1415, 0.0
    %v1432 = vmax.f32 %v1416, 0.0
    %v1433 = vmax.f32 %v1417, 0.0
    %v1434 = vmax.f32 %v1418, 0.0
    %v1435 = vmax.f32 %v1419, 0.0
    %v1436 = vmax.f32 %v1420, 0.0
    %v1437 = vmax.f32 %v1421, 0.0
    %v1438 = vmax.f32 %v1422, 0.0
    %v1439 = vadd.f32 %v1423, 0.001
    %v1440 = vadd.f32 %v1424, 0.001
    %v1441 = vadd.f32 %v1425, 0.001
    %v1442 = vadd.f32 %v1426, 0.001
    %v1443 = vadd.f32 %v1427, 0.001
    %v1444 = vadd.f32 %v1428, 0.001
    %v1445 = vadd.f32 %v1429, 0.001
    %v1446 = vadd.f32 %v1430, 0.001
    %v1447 = vadd.f32 %v1431, 0.001
    %v1448 = vadd.f32 %v1432, 0.001
    %v1449 = vadd.f32 %v1433, 0.001
    %v1450 = vadd.f32 %v1434, 0.001
    %v1451 = vadd.f32 %v1435, 0.001
    %v1452 = vadd.f32 %v1436, 0.001
    %v1453 = vadd.f32 %v1437, 0.001
    %v1454 = vadd.f32 %v1438, 0.001
    %v1455 = vrsqrt.pop %v1439
    %v1456 = vmul.f32 %v1455, %v1439
    %v1457 = vmul.f32 %v1456, %v1455
    %v1458 = vmul.f32 0.5, %v1457
    %v1459 = vsub.f32 1.5, %v1458
    %v1460 = vmul.f32 %v1455, %v1459
    %vm1461 = vweird.f32 %v1439
    %vm1462 = vweird.f32 %v1455
    %vm1463 = vmor %vm1461, %vm1462
    %v1464 = vsel %vm1463, %v1455, %v1460
    %v1465 = vrsqrt.pop %v1440
    %v1466 = vmul.f32 %v1465, %v1440
    %v1467 = vmul.f32 %v1466, %v1465
    %v1468 = vmul.f32 0.5, %v1467
    %v1469 = vsub.f32 1.5, %v1468
    %v1470 = vmul.f32 %v1465, %v1469
    %vm1471 = vweird.f32 %v1440
    %vm1472 = vweird.f32 %v1465
    %vm1473 = vmor %vm1471, %vm1472
    %v1474 = vsel %vm1473, %v1465, %v1470
    %v1475 = vrsqrt.pop %v1441
    %v1476 = vmul.f32 %v1475, %v1441
    %v1477 = vmul.f32 %v1476, %v1475
    %v1478 = vmul.f32 0.5, %v1477
    %v1479 = vsub.f32 1.5, %v1478
    %v1480 = vmul.f32 %v1475, %v1479
    %vm1481 = vweird.f32 %v1441
    %vm1482 = vweird.f32 %v1475
    %vm1483 = vmor %vm1481, %vm1482
    %v1484 = vsel %vm1483, %v1475, %v1480
    %v1485 = vrsqrt.pop %v1442
    %v1486 = vmul.f32 %v1485, %v1442
    %v1487 = vmul.f32 %v1486, %v1485
    %v1488 = vmul.f32 0.5, %v1487
    %v1489 = vsub.f32 1.5, %v1488
    %v1490 = vmul.f32 %v1485, %v1489
    %vm1491 = vweird.f32 %v1442
    %vm1492 = vweird.f32 %v1485
    %vm1493 = vmor %vm1491, %vm1492
    %v1494 = vsel %vm1493, %v1485, %v1490
    %v1495 = vrsqrt.pop %v1443
    %v1496 = vmul.f32 %v1495, %v1443
    %v1497 = vmul.f32 %v1496, %v1495
    %v1498 = vmul.f32 0.5, %v1497
    %v1499 = vsub.f32 1.5, %v1498
    %v1500 = vmul.f32 %v1495, %v1499
    %vm1501 = vweird.f32 %v1443
    %vm1502 = vweird.f32 %v1495
    %vm1503 = vmor %vm1501, %vm1502
    %v1504 = vsel %vm1503, %v1495, %v1500
    %v1505 = vrsqrt.pop %v1444
    %v1506 = vmul.f32 %v1505, %v1444
    %v1507 = vmul.f32 %v1506, %v1505
    %v1508 = vmul.f32 0.5, %v1507
    %v1509 = vsub.f32 1.5, %v1508
    %v1510 = vmul.f32 %v1505, %v1509
    %vm1511 = vweird.f32 %v1444
    %vm1512 = vweird.f32 %v1505
    %vm1513 = vmor %vm1511, %vm1512
    %v1514 = vsel %vm1513, %v1505, %v1510
    %v1515 = vrsqrt.pop %v1445
    %v1516 = vmul.f32 %v1515, %v1445
    %v1517 = vmul.f32 %v1516, %v1515
    %v1518 = vmul.f32 0.5, %v1517
    %v1519 = vsub.f32 1.5, %v1518
    %v1520 = vmul.f32 %v1515, %v1519
    %vm1521 = vweird.f32 %v1445
    %vm1522 = vweird.f32 %v1515
    %vm1523 = vmor %vm1521, %vm1522
    %v1524 = vsel %vm1523, %v1515, %v1520
    %v1525 = vrsqrt.pop %v1446
    %v1526 = vmul.f32 %v1525, %v1446
    %v1527 = vmul.f32 %v1526, %v1525
    %v1528 = vmul.f32 0.5, %v1527
    %v1529 = vsub.f32 1.5, %v1528
    %v1530 = vmul.f32 %v1525, %v1529
    %vm1531 = vweird.f32 %v1446
    %vm1532 = vweird.f32 %v1525
    %vm1533 = vmor %vm1531, %vm1532
    %v1534 = vsel %vm1533, %v1525, %v1530
    %v1535 = vrsqrt.pop %v1447
    %v1536 = vmul.f32 %v1535, %v1447
    %v1537 = vmul.f32 %v1536, %v1535
    %v1538 = vmul.f32 0.5, %v1537
    %v1539 = vsub.f32 1.5, %v1538
    %v1540 = vmul.f32 %v1535, %v1539
    %vm1541 = vweird.f32 %v1447
    %vm1542 = vweird.f32 %v1535
    %vm1543 = vmor %vm1541, %vm1542
    %v1544 = vsel %vm1543, %v1535, %v1540
    %v1545 = vrsqrt.pop %v1448
    %v1546 = vmul.f32 %v1545, %v1448
    %v1547 = vmul.f32 %v1546, %v1545
    %v1548 = vmul.f32 0.5, %v1547
    %v1549 = vsub.f32 1.5, %v1548
    %v1550 = vmul.f32 %v1545, %v1549
    %vm1551 = vweird.f32 %v1448
    %vm1552 = vweird.f32 %v1545
    %vm1553 = vmor %vm1551, %vm1552
    %v1554 = vsel %vm1553, %v1545, %v1550
    %v1555 = vrsqrt.pop %v1449
    %v1556 = vmul.f32 %v1555, %v1449
    %v1557 = vmul.f32 %v1556, %v1555
    %v1558 = vmul.f32 0.5, %v1557
    %v1559 = vsub.f32 1.5, %v1558
    %v1560 = vmul.f32 %v1555, %v1559
    %vm1561 = vweird.f32 %v1449
    %vm1562 = vweird.f32 %v1555
    %vm1563 = vmor %vm1561, %vm1562
    %v1564 = vsel %vm1563, %v1555, %v1560
    %v1565 = vrsqrt.pop %v1450
    %v1566 = vmul.f32 %v1565, %v1450
    %v1567 = vmul.f32 %v1566, %v1565
    %v1568 = vmul.f32 0.5, %v1567
    %v1569 = vsub.f32 1.5, %v1568
    %v1570 = vmul.f32 %v1565, %v1569
    %vm1571 = vweird.f32 %v1450
    %vm1572 = vweird.f32 %v1565
    %vm1573 = vmor %vm1571, %vm1572
    %v1574 = vsel %vm1573, %v1565, %v1570
    %v1575 = vrsqrt.pop %v1451
    %v1576 = vmul.f32 %v1575, %v1451
    %v1577 = vmul.f32 %v1576, %v1575
    %v1578 = vmul.f32 0.5, %v1577
    %v1579 = vsub.f32 1.5, %v1578
    %v1580 = vmul.f32 %v1575, %v1579
    %vm1581 = vweird.f32 %v1451
    %vm1582 = vweird.f32 %v1575
    %vm1583 = vmor %vm1581, %vm1582
    %v1584 = vsel %vm1583, %v1575, %v1580
    %v1585 = vrsqrt.pop %v1452
    %v1586 = vmul.f32 %v1585, %v1452
    %v1587 = vmul.f32 %v1586, %v1585
    %v1588 = vmul.f32 0.5, %v1587
    %v1589 = vsub.f32 1.5, %v1588
    %v1590 = vmul.f32 %v1585, %v1589
    %vm1591 = vweird.f32 %v1452
    %vm1592 = vweird.f32 %v1585
    %vm1593 = vmor %vm1591, %vm1592
    %v1594 = vsel %vm1593, %v1585, %v1590
    %v1595 = vrsqrt.pop %v1453
    %v1596 = vmul.f32 %v1595, %v1453
    %v1597 = vmul.f32 %v1596, %v1595
    %v1598 = vmul.f32 0.5, %v1597
    %v1599 = vsub.f32 1.5, %v1598
    %v1600 = vmul.f32 %v1595, %v1599
    %vm1601 = vweird.f32 %v1453
    %vm1602 = vweird.f32 %v1595
    %vm1603 = vmor %vm1601, %vm1602
    %v1604 = vsel %vm1603, %v1595, %v1600
    %v1605 = vrsqrt.pop %v1454
    %v1606 = vmul.f32 %v1605, %v1454
    %v1607 = vmul.f32 %v1606, %v1605
    %v1608 = vmul.f32 0.5, %v1607
    %v1609 = vsub.f32 1.5, %v1608
    %v1610 = vmul.f32 %v1605, %v1609
    %vm1611 = vweird.f32 %v1454
    %vm1612 = vweird.f32 %v1605
    %vm1613 = vmor %vm1611, %vm1612
    %v1614 = vsel %vm1613, %v1605, %v1610
    %v1615 = vld [vmem:[%s3] sm:$0xff]
    %v1616 = vld [vmem:[%s3 + $0x8] sm:$0xff]
    %v1617 = vld [vmem:[%s3 + $0x10] sm:$0xff]
    %v1618 = vld [vmem:[%s3 + $0x18] sm:$0xff]
    %v1619 = vld [vmem:[%s3 + $0x20] sm:$0xff]
    %v1620 = vld [vmem:[%s3 + $0x28] sm:$0xff]
    %v1621 = vld [vmem:[%s3 + $0x30] sm:$0xff]
    %v1622 = vld [vmem:[%s3 + $0x38] sm:$0xff]
    %v1623 = vld [vmem:[%s3 + $0x40] sm:$0xff]
    %v1624 = vld [vmem:[%s3 + $0x48] sm:$0xff]
    %v1625 = vld [vmem:[%s3 + $0x50] sm:$0xff]
    %v1626 = vld [vmem:[%s3 + $0x58] sm:$0xff]
    %v1627 = vld [vmem:[%s3 + $0x60] sm:$0xff]
    %v1628 = vld [vmem:[%s3 + $0x68] sm:$0xff]
    %v1629 = vld [vmem:[%s3 + $0x70] sm:$0xff]
    %v1630 = vld [vmem:[%s3 + $0x78] sm:$0xff]
    %v1631 = vmul.f32 %v1464, %v1615
    %v1632 = vmul.f32 %v1474, %v1616
    %v1633 = vmul.f32 %v1484, %v1617
    %v1634 = vmul.f32 %v1494, %v1618
    %v1635 = vmul.f32 %v1504, %v1619
    %v1636 = vmul.f32 %v1514, %v1620
    %v1637 = vmul.f32 %v1524, %v1621
    %v1638 = vmul.f32 %v1534, %v1622
    %v1639 = vmul.f32 %v1544, %v1623
    %v1640 = vmul.f32 %v1554, %v1624
    %v1641 = vmul.f32 %v1564, %v1625
    %v1642 = vmul.f32 %v1574, %v1626
    %v1643 = vmul.f32 %v1584, %v1627
    %v1644 = vmul.f32 %v1594, %v1628
    %v1645 = vmul.f32 %v1604, %v1629
    %v1646 = vmul.f32 %v1614, %v1630
    %v1647 = vld [vmem:[%s4] sm:$0xff]
    %v1648 = vld [vmem:[%s4 + $0x8] sm:$0xff]
    %v1649 = vld [vmem:[%s4 + $0x10] sm:$0xff]
    %v1650 = vld [vmem:[%s4 + $0x18] sm:$0xff]
    %v1651 = vld [vmem:[%s4 + $0x20] sm:$0xff]
    %v1652 = vld [vmem:[%s4 + $0x28] sm:$0xff]
    %v1653 = vld [vmem:[%s4 + $0x30] sm:$0xff]
    %v1654 = vld [vmem:[%s4 + $0x38] sm:$0xff]
    %v1655 = vld [vmem:[%s4 + $0x40] sm:$0xff]
    %v1656 = vld [vmem:[%s4 + $0x48] sm:$0xff]
    %v1657 = vld [vmem:[%s4 + $0x50] sm:$0xff]
    %v1658 = vld [vmem:[%s4 + $0x58] sm:$0xff]
    %v1659 = vld [vmem:[%s4 + $0x60] sm:$0xff]
    %v1660 = vld [vmem:[%s4 + $0x68] sm:$0xff]
    %v1661 = vld [vmem:[%s4 + $0x70] sm:$0xff]
    %v1662 = vld [vmem:[%s4 + $0x78] sm:$0xff]
    %v1663 = vmul.f32 %v1359, %v1631
    %v1664 = vmul.f32 %v1360, %v1632
    %v1665 = vmul.f32 %v1361, %v1633
    %v1666 = vmul.f32 %v1362, %v1634
    %v1667 = vmul.f32 %v1363, %v1635
    %v1668 = vmul.f32 %v1364, %v1636
    %v1669 = vmul.f32 %v1365, %v1637
    %v1670 = vmul.f32 %v1366, %v1638
    %v1671 = vmul.f32 %v1367, %v1639
    %v1672 = vmul.f32 %v1368, %v1640
    %v1673 = vmul.f32 %v1369, %v1641
    %v1674 = vmul.f32 %v1370, %v1642
    %v1675 = vmul.f32 %v1371, %v1643
    %v1676 = vmul.f32 %v1372, %v1644
    %v1677 = vmul.f32 %v1373, %v1645
    %v1678 = vmul.f32 %v1374, %v1646
    %v1679 = vsub.f32 %v1647, %v1663
    %v1680 = vsub.f32 %v1648, %v1664
    %v1681 = vsub.f32 %v1649, %v1665
    %v1682 = vsub.f32 %v1650, %v1666
    %v1683 = vsub.f32 %v1651, %v1667
    %v1684 = vsub.f32 %v1652, %v1668
    %v1685 = vsub.f32 %v1653, %v1669
    %v1686 = vsub.f32 %v1654, %v1670
    %v1687 = vsub.f32 %v1655, %v1671
    %v1688 = vsub.f32 %v1656, %v1672
    %v1689 = vsub.f32 %v1657, %v1673
    %v1690 = vsub.f32 %v1658, %v1674
    %v1691 = vsub.f32 %v1659, %v1675
    %v1692 = vsub.f32 %v1660, %v1676
    %v1693 = vsub.f32 %v1661, %v1677
    %v1694 = vsub.f32 %v1662, %v1678
    %1696 = vset.pattern.permute.xlu0 0
    %1697 = vperm.xlu0 %1696, %v1631
    %v1698 = vpop.permute.xlu0 %1697
    %1701 = vset.pattern.permute.xlu0 0
    %1702 = vperm.xlu0 %1701, %v1632
    %v1703 = vpop.permute.xlu0 %1702
    %1706 = vset.pattern.permute.xlu0 0
    %1707 = vperm.xlu0 %1706, %v1633
    %v1708 = vpop.permute.xlu0 %1707
    %1711 = vset.pattern.permute.xlu0 0
    %1712 = vperm.xlu0 %1711, %v1634
    %v1713 = vpop.permute.xlu0 %1712
    %1716 = vset.pattern.permute.xlu0 0
    %1717 = vperm.xlu0 %1716, %v1635
    %v1718 = vpop.permute.xlu0 %1717
    %1721 = vset.pattern.permute.xlu0 0
    %1722 = vperm.xlu0 %1721, %v1636
    %v1723 = vpop.permute.xlu0 %1722
    %1726 = vset.pattern.permute.xlu0 0
    %1727 = vperm.xlu0 %1726, %v1637
    %v1728 = vpop.permute.xlu0 %1727
    %1731 = vset.pattern.permute.xlu0 0
    %1732 = vperm.xlu0 %1731, %v1638
    %v1733 = vpop.permute.xlu0 %1732
    %1736 = vset.pattern.permute.xlu0 0
    %1737 = vperm.xlu0 %1736, %v1639
    %v1738 = vpop.permute.xlu0 %1737
    %1741 = vset.pattern.permute.xlu0 0
    %1742 = vperm.xlu0 %1741, %v1640
    %v1743 = vpop.permute.xlu0 %1742
    %1746 = vset.pattern.permute.xlu0 0
    %1747 = vperm.xlu0 %1746, %v1641
    %v1748 = vpop.permute.xlu0 %1747
    %1751 = vset.pattern.permute.xlu0 0
    %1752 = vperm.xlu0 %1751, %v1642
    %v1753 = vpop.permute.xlu0 %1752
    %1756 = vset.pattern.permute.xlu0 0
    %1757 = vperm.xlu0 %1756, %v1643
    %v1758 = vpop.permute.xlu0 %1757
    %1761 = vset.pattern.permute.xlu0 0
    %1762 = vperm.xlu0 %1761, %v1644
    %v1763 = vpop.permute.xlu0 %1762
    %1766 = vset.pattern.permute.xlu0 0
    %1767 = vperm.xlu0 %1766, %v1645
    %v1768 = vpop.permute.xlu0 %1767
    %1771 = vset.pattern.permute.xlu0 0
    %1772 = vperm.xlu0 %1771, %v1646
    %v1773 = vpop.permute.xlu0 %1772
    %v1775 = vmul.f32 %v898, %v1698
    %v1776 = vmul.f32 %v1192, %v1698
    %v1777 = vmul.f32 %v900, %v1703
    %v1778 = vmul.f32 %v1194, %v1703
    %v1779 = vmul.f32 %v903, %v1708
    %v1780 = vmul.f32 %v1197, %v1708
    %v1781 = vmul.f32 %v905, %v1713
    %v1782 = vmul.f32 %v1199, %v1713
    %v1783 = vmul.f32 %v908, %v1718
    %v1784 = vmul.f32 %v1202, %v1718
    %v1785 = vmul.f32 %v910, %v1723
    %v1786 = vmul.f32 %v1204, %v1723
    %v1787 = vmul.f32 %v913, %v1728
    %v1788 = vmul.f32 %v1207, %v1728
    %v1789 = vmul.f32 %v915, %v1733
    %v1790 = vmul.f32 %v1209, %v1733
    %v1791 = vmul.f32 %v918, %v1738
    %v1792 = vmul.f32 %v1212, %v1738
    %v1793 = vmul.f32 %v920, %v1743
    %v1794 = vmul.f32 %v1214, %v1743
    %v1795 = vmul.f32 %v923, %v1748
    %v1796 = vmul.f32 %v1217, %v1748
    %v1797 = vmul.f32 %v925, %v1753
    %v1798 = vmul.f32 %v1219, %v1753
    %v1799 = vmul.f32 %v928, %v1758
    %v1800 = vmul.f32 %v1222, %v1758
    %v1801 = vmul.f32 %v930, %v1763
    %v1802 = vmul.f32 %v1224, %v1763
    %v1803 = vmul.f32 %v933, %v1768
    %v1804 = vmul.f32 %v1227, %v1768
    %v1805 = vmul.f32 %v935, %v1773
    %v1806 = vmul.f32 %v1229, %v1773
    %1808 = vset.pattern.permute.xlu0 0
    %1809 = vperm.xlu0 %1808, %v1679
    %v1810 = vpop.permute.xlu0 %1809
    %1813 = vset.pattern.permute.xlu0 0
    %1814 = vperm.xlu0 %1813, %v1680
    %v1815 = vpop.permute.xlu0 %1814
    %1818 = vset.pattern.permute.xlu0 0
    %1819 = vperm.xlu0 %1818, %v1681
    %v1820 = vpop.permute.xlu0 %1819
    %1823 = vset.pattern.permute.xlu0 0
    %1824 = vperm.xlu0 %1823, %v1682
    %v1825 = vpop.permute.xlu0 %1824
    %1828 = vset.pattern.permute.xlu0 0
    %1829 = vperm.xlu0 %1828, %v1683
    %v1830 = vpop.permute.xlu0 %1829
    %1833 = vset.pattern.permute.xlu0 0
    %1834 = vperm.xlu0 %1833, %v1684
    %v1835 = vpop.permute.xlu0 %1834
    %1838 = vset.pattern.permute.xlu0 0
    %1839 = vperm.xlu0 %1838, %v1685
    %v1840 = vpop.permute.xlu0 %1839
    %1843 = vset.pattern.permute.xlu0 0
    %1844 = vperm.xlu0 %1843, %v1686
    %v1845 = vpop.permute.xlu0 %1844
    %1848 = vset.pattern.permute.xlu0 0
    %1849 = vperm.xlu0 %1848, %v1687
    %v1850 = vpop.permute.xlu0 %1849
    %1853 = vset.pattern.permute.xlu0 0
    %1854 = vperm.xlu0 %1853, %v1688
    %v1855 = vpop.permute.xlu0 %1854
    %1858 = vset.pattern.permute.xlu0 0
    %1859 = vperm.xlu0 %1858, %v1689
    %v1860 = vpop.permute.xlu0 %1859
    %1863 = vset.pattern.permute.xlu0 0
    %1864 = vperm.xlu0 %1863, %v1690
    %v1865 = vpop.permute.xlu0 %1864
    %1868 = vset.pattern.permute.xlu0 0
    %1869 = vperm.xlu0 %1868, %v1691
    %v1870 = vpop.permute.xlu0 %1869
    %1873 = vset.pattern.permute.xlu0 0
    %1874 = vperm.xlu0 %1873, %v1692
    %v1875 = vpop.permute.xlu0 %1874
    %1878 = vset.pattern.permute.xlu0 0
    %1879 = vperm.xlu0 %1878, %v1693
    %v1880 = vpop.permute.xlu0 %1879
    %1883 = vset.pattern.permute.xlu0 0
    %1884 = vperm.xlu0 %1883, %v1694
    %v1885 = vpop.permute.xlu0 %1884
    %v1887 = vadd.f32 %v1775, %v1810
    %v1888 = vadd.f32 %v1776, %v1810
    %v1889 = vadd.f32 %v1777, %v1815
    %v1890 = vadd.f32 %v1778, %v1815
    %v1891 = vadd.f32 %v1779, %v1820
    %v1892 = vadd.f32 %v1780, %v1820
    %v1893 = vadd.f32 %v1781, %v1825
    %v1894 = vadd.f32 %v1782, %v1825
    %v1895 = vadd.f32 %v1783, %v1830
    %v1896 = vadd.f32 %v1784, %v1830
    %v1897 = vadd.f32 %v1785, %v1835
    %v1898 = vadd.f32 %v1786, %v1835
    %v1899 = vadd.f32 %v1787, %v1840
    %v1900 = vadd.f32 %v1788, %v1840
    %v1901 = vadd.f32 %v1789, %v1845
    %v1902 = vadd.f32 %v1790, %v1845
    %v1903 = vadd.f32 %v1791, %v1850
    %v1904 = vadd.f32 %v1792, %v1850
    %v1905 = vadd.f32 %v1793, %v1855
    %v1906 = vadd.f32 %v1794, %v1855
    %v1907 = vadd.f32 %v1795, %v1860
    %v1908 = vadd.f32 %v1796, %v1860
    %v1909 = vadd.f32 %v1797, %v1865
    %v1910 = vadd.f32 %v1798, %v1865
    %v1911 = vadd.f32 %v1799, %v1870
    %v1912 = vadd.f32 %v1800, %v1870
    %v1913 = vadd.f32 %v1801, %v1875
    %v1914 = vadd.f32 %v1802, %v1875
    %v1915 = vadd.f32 %v1803, %v1880
    %v1916 = vadd.f32 %v1804, %v1880
    %v1917 = vadd.f32 %v1805, %v1885
    %v1918 = vadd.f32 %v1806, %v1885
    %1919 = vst [vmem:[#allocation7] sm:$0xff] %v1887
    %1920 = vst [vmem:[#allocation7 + $0x8] sm:$0xff] %v1888
    %1921 = vst [vmem:[#allocation7 + $0x10] sm:$0xff] %v1889
    %1922 = vst [vmem:[#allocation7 + $0x18] sm:$0xff] %v1890
    %1923 = vst [vmem:[#allocation7 + $0x20] sm:$0xff] %v1891
    %1924 = vst [vmem:[#allocation7 + $0x28] sm:$0xff] %v1892
    %1925 = vst [vmem:[#allocation7 + $0x30] sm:$0xff] %v1893
    %1926 = vst [vmem:[#allocation7 + $0x38] sm:$0xff] %v1894
    %1927 = vst [vmem:[#allocation7 + $0x40] sm:$0xff] %v1895
    %1928 = vst [vmem:[#allocation7 + $0x48] sm:$0xff] %v1896
    %1929 = vst [vmem:[#allocation7 + $0x50] sm:$0xff] %v1897
    %1930 = vst [vmem:[#allocation7 + $0x58] sm:$0xff] %v1898
    %1931 = vst [vmem:[#allocation7 + $0x60] sm:$0xff] %v1899
    %1932 = vst [vmem:[#allocation7 + $0x68] sm:$0xff] %v1900
    %1933 = vst [vmem:[#allocation7 + $0x70] sm:$0xff] %v1901
    %1934 = vst [vmem:[#allocation7 + $0x78] sm:$0xff] %v1902
    %1935 = vst [vmem:[#allocation7 + $0x80] sm:$0xff] %v1903
    %1936 = vst [vmem:[#allocation7 + $0x88] sm:$0xff] %v1904
    %1937 = vst [vmem:[#allocation7 + $0x90] sm:$0xff] %v1905
    %1938 = vst [vmem:[#allocation7 + $0x98] sm:$0xff] %v1906
    %1939 = vst [vmem:[#allocation7 + $0xa0] sm:$0xff] %v1907
    %1940 = vst [vmem:[#allocation7 + $0xa8] sm:$0xff] %v1908
    %1941 = vst [vmem:[#allocation7 + $0xb0] sm:$0xff] %v1909
    %1942 = vst [vmem:[#allocation7 + $0xb8] sm:$0xff] %v1910
    %1943 = vst [vmem:[#allocation7 + $0xc0] sm:$0xff] %v1911
    %1944 = vst [vmem:[#allocation7 + $0xc8] sm:$0xff] %v1912
    %1945 = vst [vmem:[#allocation7 + $0xd0] sm:$0xff] %v1913
    %1946 = vst [vmem:[#allocation7 + $0xd8] sm:$0xff] %v1914
    %1947 = vst [vmem:[#allocation7 + $0xe0] sm:$0xff] %v1915
    %1948 = vst [vmem:[#allocation7 + $0xe8] sm:$0xff] %v1916
    %1949 = vst [vmem:[#allocation7 + $0xf0] sm:$0xff] %v1917
    %1950 = vst [vmem:[#allocation7 + $0xf8] sm:$0xff] %v1918
    // Predicated region
    $region30: #{tpu_custom_call.1} parent=1 // pred_check
      _
    $region31: #{tpu_custom_call.1} parent=1 // pred_check_branch
      %1952 = sbr.rel (0) target = $region33
    $region32: #{tpu_custom_call.1} parent=1 // pred_region
      %1954 = vsyncadd [#allocation4], 0
      %s1955 = sshll.u32 [#allocation7], 4
      %s1956 = int_to_ptr.vmem [resolvable:$true] %s1955
      %s1957 = sshll.u32 %s5, 4
      %s1958 = int_to_ptr.hbm [resolvable:$true] %s1957
      %1963 = dma.vmem_to_hbm [thread:$0]  %s1956, 4096, %s1958, [#allocation4], 256, 256, 16
    $region33: #{tpu_custom_call.1} parent=1 // pred_fallthru
      _
    // Predicated region
    $region34: #{tpu_custom_call.1} parent=1 // pred_check
      _
    $region35: #{tpu_custom_call.1} parent=1 // pred_check_branch
      %1965 = sbr.rel (0) target = $region37
    $region36: #{tpu_custom_call.1} parent=1 // pred_region
      %1967 = dma.done [#allocation4], 4096
    $region37: #{tpu_custom_call.1} parent=1 // pred_fallthru
      _
    %1968 = vsyncpa [#allocation3], 1
    %1969 = vsyncpa [#allocation6], 1
    %1970 = vsyncpa [#allocation4], 1

</llo_original>
